<compile_context>
chip_gen: v6e
topology: v6e:2x2x1
jax: 0.10.0
libtpu: 0.0.40
codegen_flags: <defaults>
</compile_context>

<pallas_src>
import functools

import numpy as np
import jax
import jax.numpy as jnp
from jax.experimental import pallas as pl
from jax.experimental.pallas import tpu as pltpu


def _round_up(v, m):
    return ((v + m - 1) // m) * m


def _idetect_kernel(x_ref, w_ref, desc_ref, gxy_ref, *out_refs, stride, want_raw):
    # Fused 1x1 conv on the MXU: bf16 (co, C) @ bf16 (C, t_hw) -> f32 (co, t_hw).
    pre = jnp.dot(w_ref[...], x_ref[...], preferred_element_type=jnp.float32)

    d = desc_ref[...]                  # (co, 8) packed resident descriptor
    bias = d[:, 0:1]
    selx, sely = d[:, 1:2], d[:, 2:3]  # 1.0 on box-x / box-y channels
    whm = d[:, 3:4]                    # 1.0 on box-w/h channels
    anch = d[:, 4:5]                   # anchor value on w/h channels, 1.0 elsewhere
    xy_m = d[:, 5:6]
    rest_m = d[:, 6:7]

    pre = pre + bias
    if want_raw:
        out_refs[0][...] = pre         # raw pre-sigmoid activations (optional)

    sig = jax.nn.sigmoid(pre)

    gx = gxy_ref[0:1, :]               # (1, t_hw) exact grid-cell x
    gy = gxy_ref[1:2, :]               # (1, t_hw) exact grid-cell y
    grid_val = selx * gx + sely * gy   # (co, t_hw)

    xy = (sig * 2.0 - 0.5 + grid_val) * stride
    wh = (sig * 2.0) ** 2 * anch
    # Arithmetic select with exact 0/1 masks (all branches finite).
    out_refs[-1][...] = xy_m * xy + whm * wh + rest_m * sig


def _pick_tile(HW, C, co, n_out):
    """Largest lane tile (multiple of 128, <= 2048) fitting a ~40 MiB VMEM budget
    (safe on v7x's 64 MiB VMEM).  Returns (t_hw, HWp, vmem_estimate_bytes)."""
    HWp128 = _round_up(HW, 128)
    n128 = HWp128 // 128
    budget = 40 << 20
    # Per-lane bytes: double-buffered bf16 activations, f32 outputs, gx/gy rows.
    per_lane = 2 * C * 2 + n_out * 2 * co * 4 + 2 * 2 * 4
    fixed = 2 * (co * C * 2 + co * 8 * 4)      # weight + descriptor (2 bufs each)
    lane_cap = max(128, (budget - fixed) // per_lane)
    t128 = max(1, min(n128, lane_cap // 128, 16))
    t_hw = 128 * t128
    HWp = _round_up(HW, t_hw)
    est = fixed + per_lane * t_hw
    return t_hw, HWp, est


def idetect_layer(x_nchw, w, b, ia, im, anchors_l, stride, nc, *,
                  want_raw=True, torch_layout=True):
    """One detection level.

    Returns (raw, dec):
      raw: (B, na, H, W, no) f32 when want_raw and torch_layout, channel-major
           (B, co, HW) when torch_layout=False, None when want_raw=False.
      dec: (B, na*H*W, no) f32, or channel-major (B, co, HW) when
           torch_layout=False (row = a*no + o, lane = y*W + x).
    """
    B, C, H, W = x_nchw.shape
    na = anchors_l.shape[0]
    no = nc + 5
    co = na * no
    HW = H * W

    # --- Fold ImplicitA + conv bias + ImplicitM into the 1x1 conv (IDetect.fuse). ---
    w2d = w.reshape(co, C).astype(jnp.float32)
    ia_v = ia.reshape(C).astype(jnp.float32)
    im_v = im.reshape(co).astype(jnp.float32)
    w_f = w2d * im_v[:, None]                                          # (co, C)
    b_f = (w2d @ ia_v + b.reshape(co).astype(jnp.float32)) * im_v      # (co,)

    # --- One packed (co, 8) decode descriptor (bias + masks + anchor). ---
    cm = np.arange(co) % no
    aidx = np.arange(co) // no
    selx = (cm == 0).astype(np.float32)
    sely = (cm == 1).astype(np.float32)
    whm = ((cm == 2) | (cm == 3)).astype(np.float32)
    xy_m = selx + sely
    rest_m = 1.0 - xy_m - whm
    cm_j = jnp.asarray(cm)
    anch = jnp.where(cm_j == 2, anchors_l[aidx, 0],
                     jnp.where(cm_j == 3, anchors_l[aidx, 1], 1.0))
    desc = jnp.stack(
        [b_f, jnp.asarray(selx), jnp.asarray(sely), jnp.asarray(whm),
         anch.astype(jnp.float32), jnp.asarray(xy_m), jnp.asarray(rest_m),
         jnp.zeros((co,), jnp.float32)], axis=1)                       # (co, 8)

    # --- Lane tile from the VMEM budget; pad spatial up to a tile multiple. ---
    n_out = 2 if want_raw else 1
    t_hw, HWp, vmem_est = _pick_tile(HW, C, co, n_out)

    # bf16 MXU operands (halves the dominant HBM activation read).
    # TODO(synk): in a full network the upstream conv would emit bf16 directly;
    # here the cast is an extra cheap XLA pass on the standalone module.
    x_rows = x_nchw.reshape(B, C, HW).astype(jnp.bfloat16)
    if HWp != HW:
        x_rows = jnp.pad(x_rows, ((0, 0), (0, 0), (0, HWp - HW)))
    w_bf = w_f.astype(jnp.bfloat16)

    # Exact grid-cell coordinates streamed as a tiny (2, HWp) f32 array
    # (replaces per-tile int32 div/mod on the VPU).
    s_np = np.arange(HWp)
    gxy = jnp.asarray(np.stack([s_np % W, s_np // W], 0).astype(np.float32))

    kern = functools.partial(_idetect_kernel, stride=float(stride),
                             want_raw=want_raw)

    out_shapes, out_specs = [], []
    if want_raw:
        out_shapes.append(jax.ShapeDtypeStruct((B, co, HWp), jnp.float32))
        out_specs.append(pl.BlockSpec((None, co, t_hw), lambda bb, i: (bb, 0, i)))
    out_shapes.append(jax.ShapeDtypeStruct((B, co, HWp), jnp.float32))
    out_specs.append(pl.BlockSpec((None, co, t_hw), lambda bb, i: (bb, 0, i)))

    outs = pl.pallas_call(
        kern,
        out_shape=tuple(out_shapes),
        grid=(B, HWp // t_hw),
        in_specs=[
            pl.BlockSpec((None, C, t_hw), lambda bb, i: (bb, 0, i)),   # activations
            pl.BlockSpec((co, C), lambda bb, i: (0, 0)),               # fused weight
            pl.BlockSpec((co, 8), lambda bb, i: (0, 0)),               # descriptor
            pl.BlockSpec((2, t_hw), lambda bb, i: (0, i)),             # gx/gy rows
        ],
        out_specs=tuple(out_specs),
        compiler_params=pltpu.CompilerParams(
            # TODO(synk): on v7x use pltpu.CORE_PARALLEL on the batch axis to
            # shard the grid across the two TensorCores.
            dimension_semantics=("parallel", "parallel"),
            vmem_limit_bytes=int(min(max(2 * vmem_est, 32 << 20), 48 << 20))),
    )(x_rows, w_bf, desc, gxy)

    if want_raw:
        raw_cs, dec_cs = outs
    else:
        raw_cs = None
        (dec_cs,) = outs

    if not torch_layout:
        raw = None if raw_cs is None else raw_cs[:, :, :HW]
        return raw, dec_cs[:, :, :HW]

    # Glue back to the PyTorch output layouts (extra HBM passes; use
    # torch_layout=False downstream and convert only post-NMS survivors).
    raw = None
    if raw_cs is not None:
        raw = raw_cs[:, :, :HW].reshape(B, na, no, H, W).transpose(0, 1, 3, 4, 2)
    dec = dec_cs[:, :, :HW].reshape(B, na, no, HW).transpose(0, 1, 3, 2)
    dec = dec.reshape(B, na * HW, no)
    return raw, dec


def idetect_forward(xs, params, anchors_arr, *, strides, nc, training=False,
                    want_raw=True, torch_layout=True):
    """Mirrors IDetect.forward.

    training=True  -> list of raw (B, na, H, W, no) feature maps.
    training=False -> (decoded, raw_list); with torch_layout=True decoded is the
                      concatenated (B, sum(na*H*W), no) tensor (PyTorch semantics),
                      otherwise a list of per-level channel-major (B, co, H*W)
                      slabs (skips the post-kernel transpose passes).
    """
    # TODO(synk): fuse the three levels into a single pallas_call (level grid axis
    # + PrefetchScalarGridSpec offset tables) to amortize launch overhead on the
    # small 8x8 / 4x4 feature maps.
    raws, zs = [], []
    need_raw = training or want_raw
    for i in range(len(xs)):
        w, b, ia, im = params[i]
        raw, dec = idetect_layer(xs[i], w, b, ia, im, anchors_arr[i], strides[i],
                                 nc, want_raw=need_raw,
                                 torch_layout=(torch_layout or training))
        raws.append(raw)
        zs.append(dec)
    if training:
        return raws
    if torch_layout:
        return jnp.concatenate(zs, 1), raws
    return zs, raws


def init_params(key, nc, anchors, ch):
    """Deterministic synthetic params matching IDetect.__init__ shapes."""
    no = nc + 5
    na = len(anchors[0]) // 2
    co = na * no
    params = []
    for c in ch:
        key, k1, k2, k3, k4 = jax.random.split(key, 5)
        w = jax.random.normal(k1, (co, c, 1, 1), jnp.float32) / np.sqrt(c)   # Conv2d weight
        b = jax.random.normal(k2, (co,), jnp.float32) * 0.1                  # Conv2d bias
        ia = jax.random.normal(k3, (1, c, 1, 1), jnp.float32) * 0.02         # ImplicitA
        im = 1.0 + jax.random.normal(k4, (1, co, 1, 1), jnp.float32) * 0.02  # ImplicitM
        params.append((w, b, ia, im))
    return params


def ref_forward(xs, params, strides, nc, anchors_arr):
    """Pure-JAX f32 reference following the PyTorch code line-by-line (eval mode)."""
    no = nc + 5
    na = anchors_arr.shape[1]
    zs, raws = [], []
    for i, x in enumerate(xs):
        w, b, ia, im = params[i]
        B, C, H, W = x.shape
        co = na * no
        xin = x + ia.reshape(1, C, 1, 1)
        out = jnp.einsum('bchw,oc->bohw', xin, w.reshape(co, C)) + b.reshape(1, co, 1, 1)
        out = out * im.reshape(1, co, 1, 1)
        raw = out.reshape(B, na, no, H, W).transpose(0, 1, 3, 4, 2)   # (B, na, H, W, no)
        sig = jax.nn.sigmoid(raw)
        gy, gx = jnp.meshgrid(jnp.arange(H, dtype=jnp.float32),
                              jnp.arange(W, dtype=jnp.float32), indexing="ij")
        grid = jnp.stack([gx, gy], -1)[None, None]                    # (1,1,H,W,2)
        xy = (sig[..., 0:2] * 2.0 - 0.5 + grid) * strides[i]
        wh = (sig[..., 2:4] * 2.0) ** 2 * anchors_arr[i].reshape(1, na, 1, 1, 2)
        dec = jnp.concatenate([xy, wh, sig[..., 4:]], -1)
        raws.append(raw)
        zs.append(dec.reshape(B, -1, no))
    return jnp.concatenate(zs, 1), raws


if __name__ == "__main__":
    nc = 3                              # small class count -> no = 8
    anchors = [[10, 13, 16, 30, 33, 23],
               [30, 61, 62, 45, 59, 119],
               [116, 90, 156, 198, 373, 326]]
    ch = (16, 32, 64)
    strides = (8.0, 16.0, 32.0)         # IDetect.stride (set externally in the repo)
    spatial = ((16, 16), (8, 8), (4, 4))
    B = 2

    key = jax.random.PRNGKey(0)
    kp, kx = jax.random.split(key)
    params = init_params(kp, nc, anchors, ch)
    anchors_arr = jnp.asarray(anchors, jnp.float32).reshape(len(anchors), -1, 2)

    xkeys = jax.random.split(kx, len(ch))
    xs = [jax.random.normal(xkeys[i], (B, ch[i], spatial[i][0], spatial[i][1]),
                            jnp.float32) for i in range(len(ch))]

    # Default (PyTorch-semantics) path: decoded cat + raw list, PyTorch layouts.
    fwd = jax.jit(functools.partial(idetect_forward, strides=strides, nc=nc,
                                    training=False))
    z, x_out = fwd(xs, params, anchors_arr)
    jax.block_until_ready(z)

    # Correctness vs the pure-f32 reference.  Tolerances are loosened because the
    # kernel uses bf16 MXU operands (errors amplified by anchor scale <= 373 and
    # stride <= 32 in the decode); raw pre-activations are checked tightly.
    z_ref, x_ref = ref_forward(xs, params, strides, nc, anchors_arr)
    assert z.shape == z_ref.shape
    assert np.allclose(np.asarray(z), np.asarray(z_ref), atol=1.0, rtol=0.05)
    for a, r in zip(x_out, x_ref):
        assert a.shape == r.shape
        assert np.allclose(np.asarray(a), np.asarray(r), atol=0.05, rtol=0.05)

    # Fast path from the perf review: no raw output, channel-major decoded slabs
    # (skips one f32 HBM write stream and the post-kernel transpose passes).
    fwd_fast = jax.jit(functools.partial(idetect_forward, strides=strides, nc=nc,
                                         training=False, want_raw=False,
                                         torch_layout=False))
    zs_cm, raws_none = fwd_fast(xs, params, anchors_arr)
    jax.block_until_ready(zs_cm)
    assert all(r is None for r in raws_none)
    no = nc + 5
    na = anchors_arr.shape[1]
    off = 0
    for d in zs_cm:
        Bx, co, HW = d.shape
        conv = np.asarray(d).reshape(Bx, na, no, HW).transpose(0, 1, 3, 2)
        conv = conv.reshape(Bx, na * HW, no)
        ref_i = np.asarray(z_ref[:, off:off + na * HW])
        assert np.allclose(conv, ref_i, atol=1.0, rtol=0.05)
        off += na * HW

    print("KERNEL_OK")
</pallas_src>

<mosaic_0001>
module attributes {stable_mosaic.version = 11 : i64} {
  func.func @_idetect_kernel(%arg0: i32, %arg1: i32, %arg2: memref<1x64x128xbf16, #tpu.memory_space<vmem>>, %arg3: memref<24x64xbf16, #tpu.memory_space<vmem>>, %arg4: memref<24x8xf32, #tpu.memory_space<vmem>>, %arg5: memref<2x128xf32, #tpu.memory_space<vmem>>, %arg6: memref<1x24x128xf32, #tpu.memory_space<vmem>>, %arg7: memref<1x24x128xf32, #tpu.memory_space<vmem>>) attributes {dimension_semantics = [#tpu.dimension_semantics<parallel>, #tpu.dimension_semantics<parallel>], iteration_bounds = array<i64: 2, 1>, scalar_prefetch = 0 : i64, scratch_operands = 0 : i64, tpu.core_type = #tpu.core_type<tc>, window_params = [{transform_indices = @transform_0, window_bounds = array<i64: 1, 64, 128>}, {pipeline_mode = #tpu.pipeline_mode<synchronous>, transform_indices = @transform_1, window_bounds = array<i64: 24, 64>}, {pipeline_mode = #tpu.pipeline_mode<synchronous>, transform_indices = @transform_2, window_bounds = array<i64: 24, 8>}, {transform_indices = @transform_3, window_bounds = array<i64: 2, 128>}, {transform_indices = @transform_4, window_bounds = array<i64: 1, 24, 128>}, {transform_indices = @transform_5, window_bounds = array<i64: 1, 24, 128>}]} {
    %c0 = arith.constant 0 : index
    %c0_0 = arith.constant 0 : index
    %0 = vector.load %arg3[%c0, %c0_0] : memref<24x64xbf16, #tpu.memory_space<vmem>>, vector<24x64xbf16>
    %c0_1 = arith.constant 0 : index
    %c0_2 = arith.constant 0 : index
    %c0_3 = arith.constant 0 : index
    %1 = vector.load %arg2[%c0_1, %c0_2, %c0_3] : memref<1x64x128xbf16, #tpu.memory_space<vmem>>, vector<1x64x128xbf16>
    %2 = vector.shape_cast %1 : vector<1x64x128xbf16> to vector<64x128xbf16>
    %cst = arith.constant dense<0.000000e+00> : vector<24x128xf32>
    %3 = tpu.matmul %0, %2, %cst {dimension_numbers = #tpu.dot_dimension_numbers<[1], [0], [0], [1], [0, 0, 1, 1], [], []>} : vector<24x64xbf16>, vector<64x128xbf16>, vector<24x128xf32> -> vector<24x128xf32>
    %c0_4 = arith.constant 0 : index
    %c0_5 = arith.constant 0 : index
    %4 = vector.load %arg4[%c0_4, %c0_5] : memref<24x8xf32, #tpu.memory_space<vmem>>, vector<24x8xf32>
    %5 = vector.extract_strided_slice %4 {offsets = [0, 0], sizes = [24, 1], strides = [1, 1]} : vector<24x8xf32> to vector<24x1xf32>
    %6 = vector.extract_strided_slice %4 {offsets = [0, 1], sizes = [24, 1], strides = [1, 1]} : vector<24x8xf32> to vector<24x1xf32>
    %7 = vector.extract_strided_slice %4 {offsets = [0, 2], sizes = [24, 1], strides = [1, 1]} : vector<24x8xf32> to vector<24x1xf32>
    %8 = vector.extract_strided_slice %4 {offsets = [0, 3], sizes = [24, 1], strides = [1, 1]} : vector<24x8xf32> to vector<24x1xf32>
    %9 = vector.extract_strided_slice %4 {offsets = [0, 4], sizes = [24, 1], strides = [1, 1]} : vector<24x8xf32> to vector<24x1xf32>
    %10 = vector.extract_strided_slice %4 {offsets = [0, 5], sizes = [24, 1], strides = [1, 1]} : vector<24x8xf32> to vector<24x1xf32>
    %11 = vector.extract_strided_slice %4 {offsets = [0, 6], sizes = [24, 1], strides = [1, 1]} : vector<24x8xf32> to vector<24x1xf32>
    %12 = vector.broadcast %5 : vector<24x1xf32> to vector<24x128xf32>
    %13 = arith.addf %3, %12 : vector<24x128xf32>
    %c0_6 = arith.constant 0 : index
    %c0_7 = arith.constant 0 : index
    %c0_8 = arith.constant 0 : index
    %14 = vector.load %arg6[%c0_6, %c0_7, %c0_8] : memref<1x24x128xf32, #tpu.memory_space<vmem>>, vector<1x24x128xf32>
    %15 = vector.shape_cast %14 : vector<1x24x128xf32> to vector<24x128xf32>
    %16 = vector.shape_cast %13 : vector<24x128xf32> to vector<1x24x128xf32>
    tpu.vector_store %arg6[%c0_6, %c0_7, %c0_8], %16 {strides = array<i32>} : memref<1x24x128xf32, #tpu.memory_space<vmem>>, vector<1x24x128xf32>,
    %17 = arith.negf %13 : vector<24x128xf32>
    %18 = math.exp %17 : vector<24x128xf32>
    %cst_9 = arith.constant 1.000000e+00 : f32
    %19 = vector.broadcast %cst_9 : f32 to vector<24x128xf32>
    %20 = arith.addf %19, %18 : vector<24x128xf32>
    %21 = arith.divf %19, %20 : vector<24x128xf32>
    %c0_10 = arith.constant 0 : index
    %c0_11 = arith.constant 0 : index
    %22 = vector.load %arg5[%c0_10, %c0_11] : memref<2x128xf32, #tpu.memory_space<vmem>>, vector<1x128xf32>
    %c1 = arith.constant 1 : index
    %c0_12 = arith.constant 0 : index
    %23 = vector.load %arg5[%c1, %c0_12] : memref<2x128xf32, #tpu.memory_space<vmem>>, vector<1x128xf32>
    %24 = vector.broadcast %6 : vector<24x1xf32> to vector<24x128xf32>
    %25 = vector.broadcast %22 : vector<1x128xf32> to vector<24x128xf32>
    %26 = arith.mulf %24, %25 : vector<24x128xf32>
    %27 = vector.broadcast %7 : vector<24x1xf32> to vector<24x128xf32>
    %28 = vector.broadcast %23 : vector<1x128xf32> to vector<24x128xf32>
    %29 = arith.mulf %27, %28 : vector<24x128xf32>
    %30 = arith.addf %26, %29 : vector<24x128xf32>
    %cst_13 = arith.constant 2.000000e+00 : f32
    %31 = vector.broadcast %cst_13 : f32 to vector<24x128xf32>
    %32 = arith.mulf %21, %31 : vector<24x128xf32>
    %cst_14 = arith.constant 5.000000e-01 : f32
    %33 = vector.broadcast %cst_14 : f32 to vector<24x128xf32>
    %34 = arith.subf %32, %33 : vector<24x128xf32>
    %35 = arith.addf %34, %30 : vector<24x128xf32>
    %cst_15 = arith.constant 3.200000e+01 : f32
    %36 = vector.broadcast %cst_15 : f32 to vector<24x128xf32>
    %37 = arith.mulf %35, %36 : vector<24x128xf32>
    %cst_16 = arith.constant 2.000000e+00 : f32
    %38 = vector.broadcast %cst_16 : f32 to vector<24x128xf32>
    %39 = arith.mulf %21, %38 : vector<24x128xf32>
    %40 = arith.mulf %39, %39 : vector<24x128xf32>
    %41 = vector.broadcast %9 : vector<24x1xf32> to vector<24x128xf32>
    %42 = arith.mulf %40, %41 : vector<24x128xf32>
    %43 = vector.broadcast %10 : vector<24x1xf32> to vector<24x128xf32>
    %44 = arith.mulf %43, %37 : vector<24x128xf32>
    %45 = vector.broadcast %8 : vector<24x1xf32> to vector<24x128xf32>
    %46 = arith.mulf %45, %42 : vector<24x128xf32>
    %47 = arith.addf %44, %46 : vector<24x128xf32>
    %48 = vector.broadcast %11 : vector<24x1xf32> to vector<24x128xf32>
    %49 = arith.mulf %48, %21 : vector<24x128xf32>
    %50 = arith.addf %47, %49 : vector<24x128xf32>
    %c0_17 = arith.constant 0 : index
    %c0_18 = arith.constant 0 : index
    %c0_19 = arith.constant 0 : index
    %51 = vector.load %arg7[%c0_17, %c0_18, %c0_19] : memref<1x24x128xf32, #tpu.memory_space<vmem>>, vector<1x24x128xf32>
    %52 = vector.shape_cast %51 : vector<1x24x128xf32> to vector<24x128xf32>
    %53 = vector.shape_cast %50 : vector<24x128xf32> to vector<1x24x128xf32>
    tpu.vector_store %arg7[%c0_17, %c0_18, %c0_19], %53 {strides = array<i32>} : memref<1x24x128xf32, #tpu.memory_space<vmem>>, vector<1x24x128xf32>,
    return
  }
  func.func @transform_0(%arg0: i32, %arg1: i32) -> (i32, i32, i32) {
    %c0_i32 = arith.constant 0 : i32
    %c0_i32_0 = arith.constant 0 : i32
    return %arg0, %c0_i32, %arg1 : i32, i32, i32
  }
  func.func @transform_1(%arg0: i32, %arg1: i32) -> (i32, i32) {
    %c0_i32 = arith.constant 0 : i32
    %c0_i32_0 = arith.constant 0 : i32
    %c0_i32_1 = arith.constant 0 : i32
    return %c0_i32, %c0_i32_0 : i32, i32
  }
  func.func @transform_2(%arg0: i32, %arg1: i32) -> (i32, i32) {
    %c0_i32 = arith.constant 0 : i32
    %c0_i32_0 = arith.constant 0 : i32
    %c0_i32_1 = arith.constant 0 : i32
    return %c0_i32, %c0_i32_0 : i32, i32
  }
  func.func @transform_3(%arg0: i32, %arg1: i32) -> (i32, i32) {
    %c0_i32 = arith.constant 0 : i32
    %c0_i32_0 = arith.constant 0 : i32
    return %c0_i32, %arg1 : i32, i32
  }
  func.func @transform_4(%arg0: i32, %arg1: i32) -> (i32, i32, i32) {
    %c0_i32 = arith.constant 0 : i32
    %c0_i32_0 = arith.constant 0 : i32
    return %arg0, %c0_i32, %arg1 : i32, i32, i32
  }
  func.func @transform_5(%arg0: i32, %arg1: i32) -> (i32, i32, i32) {
    %c0_i32 = arith.constant 0 : i32
    %c0_i32_0 = arith.constant 0 : i32
    return %arg0, %c0_i32, %arg1 : i32, i32, i32
  }
}

module attributes {stable_mosaic.version = 11 : i64} {
  func.func @_idetect_kernel(%arg0: i32, %arg1: i32, %arg2: memref<1x32x128xbf16, #tpu.memory_space<vmem>>, %arg3: memref<24x32xbf16, #tpu.memory_space<vmem>>, %arg4: memref<24x8xf32, #tpu.memory_space<vmem>>, %arg5: memref<2x128xf32, #tpu.memory_space<vmem>>, %arg6: memref<1x24x128xf32, #tpu.memory_space<vmem>>, %arg7: memref<1x24x128xf32, #tpu.memory_space<vmem>>) attributes {dimension_semantics = [#tpu.dimension_semantics<parallel>, #tpu.dimension_semantics<parallel>], iteration_bounds = array<i64: 2, 1>, scalar_prefetch = 0 : i64, scratch_operands = 0 : i64, tpu.core_type = #tpu.core_type<tc>, window_params = [{transform_indices = @transform_0, window_bounds = array<i64: 1, 32, 128>}, {pipeline_mode = #tpu.pipeline_mode<synchronous>, transform_indices = @transform_1, window_bounds = array<i64: 24, 32>}, {pipeline_mode = #tpu.pipeline_mode<synchronous>, transform_indices = @transform_2, window_bounds = array<i64: 24, 8>}, {transform_indices = @transform_3, window_bounds = array<i64: 2, 128>}, {transform_indices = @transform_4, window_bounds = array<i64: 1, 24, 128>}, {transform_indices = @transform_5, window_bounds = array<i64: 1, 24, 128>}]} {
    %c0 = arith.constant 0 : index
    %c0_0 = arith.constant 0 : index
    %0 = vector.load %arg3[%c0, %c0_0] : memref<24x32xbf16, #tpu.memory_space<vmem>>, vector<24x32xbf16>
    %c0_1 = arith.constant 0 : index
    %c0_2 = arith.constant 0 : index
    %c0_3 = arith.constant 0 : index
    %1 = vector.load %arg2[%c0_1, %c0_2, %c0_3] : memref<1x32x128xbf16, #tpu.memory_space<vmem>>, vector<1x32x128xbf16>
    %2 = vector.shape_cast %1 : vector<1x32x128xbf16> to vector<32x128xbf16>
    %cst = arith.constant dense<0.000000e+00> : vector<24x128xf32>
    %3 = tpu.matmul %0, %2, %cst {dimension_numbers = #tpu.dot_dimension_numbers<[1], [0], [0], [1], [0, 0, 1, 1], [], []>} : vector<24x32xbf16>, vector<32x128xbf16>, vector<24x128xf32> -> vector<24x128xf32>
    %c0_4 = arith.constant 0 : index
    %c0_5 = arith.constant 0 : index
    %4 = vector.load %arg4[%c0_4, %c0_5] : memref<24x8xf32, #tpu.memory_space<vmem>>, vector<24x8xf32>
    %5 = vector.extract_strided_slice %4 {offsets = [0, 0], sizes = [24, 1], strides = [1, 1]} : vector<24x8xf32> to vector<24x1xf32>
    %6 = vector.extract_strided_slice %4 {offsets = [0, 1], sizes = [24, 1], strides = [1, 1]} : vector<24x8xf32> to vector<24x1xf32>
    %7 = vector.extract_strided_slice %4 {offsets = [0, 2], sizes = [24, 1], strides = [1, 1]} : vector<24x8xf32> to vector<24x1xf32>
    %8 = vector.extract_strided_slice %4 {offsets = [0, 3], sizes = [24, 1], strides = [1, 1]} : vector<24x8xf32> to vector<24x1xf32>
    %9 = vector.extract_strided_slice %4 {offsets = [0, 4], sizes = [24, 1], strides = [1, 1]} : vector<24x8xf32> to vector<24x1xf32>
    %10 = vector.extract_strided_slice %4 {offsets = [0, 5], sizes = [24, 1], strides = [1, 1]} : vector<24x8xf32> to vector<24x1xf32>
    %11 = vector.extract_strided_slice %4 {offsets = [0, 6], sizes = [24, 1], strides = [1, 1]} : vector<24x8xf32> to vector<24x1xf32>
    %12 = vector.broadcast %5 : vector<24x1xf32> to vector<24x128xf32>
    %13 = arith.addf %3, %12 : vector<24x128xf32>
    %c0_6 = arith.constant 0 : index
    %c0_7 = arith.constant 0 : index
    %c0_8 = arith.constant 0 : index
    %14 = vector.load %arg6[%c0_6, %c0_7, %c0_8] : memref<1x24x128xf32, #tpu.memory_space<vmem>>, vector<1x24x128xf32>
    %15 = vector.shape_cast %14 : vector<1x24x128xf32> to vector<24x128xf32>
    %16 = vector.shape_cast %13 : vector<24x128xf32> to vector<1x24x128xf32>
    tpu.vector_store %arg6[%c0_6, %c0_7, %c0_8], %16 {strides = array<i32>} : memref<1x24x128xf32, #tpu.memory_space<vmem>>, vector<1x24x128xf32>,
    %17 = arith.negf %13 : vector<24x128xf32>
    %18 = math.exp %17 : vector<24x128xf32>
    %cst_9 = arith.constant 1.000000e+00 : f32
    %19 = vector.broadcast %cst_9 : f32 to vector<24x128xf32>
    %20 = arith.addf %19, %18 : vector<24x128xf32>
    %21 = arith.divf %19, %20 : vector<24x128xf32>
    %c0_10 = arith.constant 0 : index
    %c0_11 = arith.constant 0 : index
    %22 = vector.load %arg5[%c0_10, %c0_11] : memref<2x128xf32, #tpu.memory_space<vmem>>, vector<1x128xf32>
    %c1 = arith.constant 1 : index
    %c0_12 = arith.constant 0 : index
    %23 = vector.load %arg5[%c1, %c0_12] : memref<2x128xf32, #tpu.memory_space<vmem>>, vector<1x128xf32>
    %24 = vector.broadcast %6 : vector<24x1xf32> to vector<24x128xf32>
    %25 = vector.broadcast %22 : vector<1x128xf32> to vector<24x128xf32>
    %26 = arith.mulf %24, %25 : vector<24x128xf32>
    %27 = vector.broadcast %7 : vector<24x1xf32> to vector<24x128xf32>
    %28 = vector.broadcast %23 : vector<1x128xf32> to vector<24x128xf32>
    %29 = arith.mulf %27, %28 : vector<24x128xf32>
    %30 = arith.addf %26, %29 : vector<24x128xf32>
    %cst_13 = arith.constant 2.000000e+00 : f32
    %31 = vector.broadcast %cst_13 : f32 to vector<24x128xf32>
    %32 = arith.mulf %21, %31 : vector<24x128xf32>
    %cst_14 = arith.constant 5.000000e-01 : f32
    %33 = vector.broadcast %cst_14 : f32 to vector<24x128xf32>
    %34 = arith.subf %32, %33 : vector<24x128xf32>
    %35 = arith.addf %34, %30 : vector<24x128xf32>
    %cst_15 = arith.constant 1.600000e+01 : f32
    %36 = vector.broadcast %cst_15 : f32 to vector<24x128xf32>
    %37 = arith.mulf %35, %36 : vector<24x128xf32>
    %cst_16 = arith.constant 2.000000e+00 : f32
    %38 = vector.broadcast %cst_16 : f32 to vector<24x128xf32>
    %39 = arith.mulf %21, %38 : vector<24x128xf32>
    %40 = arith.mulf %39, %39 : vector<24x128xf32>
    %41 = vector.broadcast %9 : vector<24x1xf32> to vector<24x128xf32>
    %42 = arith.mulf %40, %41 : vector<24x128xf32>
    %43 = vector.broadcast %10 : vector<24x1xf32> to vector<24x128xf32>
    %44 = arith.mulf %43, %37 : vector<24x128xf32>
    %45 = vector.broadcast %8 : vector<24x1xf32> to vector<24x128xf32>
    %46 = arith.mulf %45, %42 : vector<24x128xf32>
    %47 = arith.addf %44, %46 : vector<24x128xf32>
    %48 = vector.broadcast %11 : vector<24x1xf32> to vector<24x128xf32>
    %49 = arith.mulf %48, %21 : vector<24x128xf32>
    %50 = arith.addf %47, %49 : vector<24x128xf32>
    %c0_17 = arith.constant 0 : index
    %c0_18 = arith.constant 0 : index
    %c0_19 = arith.constant 0 : index
    %51 = vector.load %arg7[%c0_17, %c0_18, %c0_19] : memref<1x24x128xf32, #tpu.memory_space<vmem>>, vector<1x24x128xf32>
    %52 = vector.shape_cast %51 : vector<1x24x128xf32> to vector<24x128xf32>
    %53 = vector.shape_cast %50 : vector<24x128xf32> to vector<1x24x128xf32>
    tpu.vector_store %arg7[%c0_17, %c0_18, %c0_19], %53 {strides = array<i32>} : memref<1x24x128xf32, #tpu.memory_space<vmem>>, vector<1x24x128xf32>,
    return
  }
  func.func @transform_0(%arg0: i32, %arg1: i32) -> (i32, i32, i32) {
    %c0_i32 = arith.constant 0 : i32
    %c0_i32_0 = arith.constant 0 : i32
    return %arg0, %c0_i32, %arg1 : i32, i32, i32
  }
  func.func @transform_1(%arg0: i32, %arg1: i32) -> (i32, i32) {
    %c0_i32 = arith.constant 0 : i32
    %c0_i32_0 = arith.constant 0 : i32
    %c0_i32_1 = arith.constant 0 : i32
    return %c0_i32, %c0_i32_0 : i32, i32
  }
  func.func @transform_2(%arg0: i32, %arg1: i32) -> (i32, i32) {
    %c0_i32 = arith.constant 0 : i32
    %c0_i32_0 = arith.constant 0 : i32
    %c0_i32_1 = arith.constant 0 : i32
    return %c0_i32, %c0_i32_0 : i32, i32
  }
  func.func @transform_3(%arg0: i32, %arg1: i32) -> (i32, i32) {
    %c0_i32 = arith.constant 0 : i32
    %c0_i32_0 = arith.constant 0 : i32
    return %c0_i32, %arg1 : i32, i32
  }
  func.func @transform_4(%arg0: i32, %arg1: i32) -> (i32, i32, i32) {
    %c0_i32 = arith.constant 0 : i32
    %c0_i32_0 = arith.constant 0 : i32
    return %arg0, %c0_i32, %arg1 : i32, i32, i32
  }
  func.func @transform_5(%arg0: i32, %arg1: i32) -> (i32, i32, i32) {
    %c0_i32 = arith.constant 0 : i32
    %c0_i32_0 = arith.constant 0 : i32
    return %arg0, %c0_i32, %arg1 : i32, i32, i32
  }
}

module attributes {stable_mosaic.version = 11 : i64} {
  func.func @_idetect_kernel(%arg0: i32, %arg1: i32, %arg2: memref<1x16x256xbf16, #tpu.memory_space<vmem>>, %arg3: memref<24x16xbf16, #tpu.memory_space<vmem>>, %arg4: memref<24x8xf32, #tpu.memory_space<vmem>>, %arg5: memref<2x256xf32, #tpu.memory_space<vmem>>, %arg6: memref<1x24x256xf32, #tpu.memory_space<vmem>>, %arg7: memref<1x24x256xf32, #tpu.memory_space<vmem>>) attributes {dimension_semantics = [#tpu.dimension_semantics<parallel>, #tpu.dimension_semantics<parallel>], iteration_bounds = array<i64: 2, 1>, scalar_prefetch = 0 : i64, scratch_operands = 0 : i64, tpu.core_type = #tpu.core_type<tc>, window_params = [{transform_indices = @transform_0, window_bounds = array<i64: 1, 16, 256>}, {pipeline_mode = #tpu.pipeline_mode<synchronous>, transform_indices = @transform_1, window_bounds = array<i64: 24, 16>}, {pipeline_mode = #tpu.pipeline_mode<synchronous>, transform_indices = @transform_2, window_bounds = array<i64: 24, 8>}, {transform_indices = @transform_3, window_bounds = array<i64: 2, 256>}, {transform_indices = @transform_4, window_bounds = array<i64: 1, 24, 256>}, {transform_indices = @transform_5, window_bounds = array<i64: 1, 24, 256>}]} {
    %c0 = arith.constant 0 : index
    %c0_0 = arith.constant 0 : index
    %0 = vector.load %arg3[%c0, %c0_0] : memref<24x16xbf16, #tpu.memory_space<vmem>>, vector<24x16xbf16>
    %c0_1 = arith.constant 0 : index
    %c0_2 = arith.constant 0 : index
    %c0_3 = arith.constant 0 : index
    %1 = vector.load %arg2[%c0_1, %c0_2, %c0_3] : memref<1x16x256xbf16, #tpu.memory_space<vmem>>, vector<1x16x256xbf16>
    %2 = vector.shape_cast %1 : vector<1x16x256xbf16> to vector<16x256xbf16>
    %cst = arith.constant dense<0.000000e+00> : vector<24x256xf32>
    %3 = tpu.matmul %0, %2, %cst {dimension_numbers = #tpu.dot_dimension_numbers<[1], [0], [0], [1], [0, 0, 1, 1], [], []>} : vector<24x16xbf16>, vector<16x256xbf16>, vector<24x256xf32> -> vector<24x256xf32>
    %c0_4 = arith.constant 0 : index
    %c0_5 = arith.constant 0 : index
    %4 = vector.load %arg4[%c0_4, %c0_5] : memref<24x8xf32, #tpu.memory_space<vmem>>, vector<24x8xf32>
    %5 = vector.extract_strided_slice %4 {offsets = [0, 0], sizes = [24, 1], strides = [1, 1]} : vector<24x8xf32> to vector<24x1xf32>
    %6 = vector.extract_strided_slice %4 {offsets = [0, 1], sizes = [24, 1], strides = [1, 1]} : vector<24x8xf32> to vector<24x1xf32>
    %7 = vector.extract_strided_slice %4 {offsets = [0, 2], sizes = [24, 1], strides = [1, 1]} : vector<24x8xf32> to vector<24x1xf32>
    %8 = vector.extract_strided_slice %4 {offsets = [0, 3], sizes = [24, 1], strides = [1, 1]} : vector<24x8xf32> to vector<24x1xf32>
    %9 = vector.extract_strided_slice %4 {offsets = [0, 4], sizes = [24, 1], strides = [1, 1]} : vector<24x8xf32> to vector<24x1xf32>
    %10 = vector.extract_strided_slice %4 {offsets = [0, 5], sizes = [24, 1], strides = [1, 1]} : vector<24x8xf32> to vector<24x1xf32>
    %11 = vector.extract_strided_slice %4 {offsets = [0, 6], sizes = [24, 1], strides = [1, 1]} : vector<24x8xf32> to vector<24x1xf32>
    %12 = vector.broadcast %5 : vector<24x1xf32> to vector<24x256xf32>
    %13 = arith.addf %3, %12 : vector<24x256xf32>
    %c0_6 = arith.constant 0 : index
    %c0_7 = arith.constant 0 : index
    %c0_8 = arith.constant 0 : index
    %14 = vector.load %arg6[%c0_6, %c0_7, %c0_8] : memref<1x24x256xf32, #tpu.memory_space<vmem>>, vector<1x24x256xf32>
    %15 = vector.shape_cast %14 : vector<1x24x256xf32> to vector<24x256xf32>
    %16 = vector.shape_cast %13 : vector<24x256xf32> to vector<1x24x256xf32>
    tpu.vector_store %arg6[%c0_6, %c0_7, %c0_8], %16 {strides = array<i32>} : memref<1x24x256xf32, #tpu.memory_space<vmem>>, vector<1x24x256xf32>,
    %17 = arith.negf %13 : vector<24x256xf32>
    %18 = math.exp %17 : vector<24x256xf32>
    %cst_9 = arith.constant 1.000000e+00 : f32
    %19 = vector.broadcast %cst_9 : f32 to vector<24x256xf32>
    %20 = arith.addf %19, %18 : vector<24x256xf32>
    %21 = arith.divf %19, %20 : vector<24x256xf32>
    %c0_10 = arith.constant 0 : index
    %c0_11 = arith.constant 0 : index
    %22 = vector.load %arg5[%c0_10, %c0_11] : memref<2x256xf32, #tpu.memory_space<vmem>>, vector<1x256xf32>
    %c1 = arith.constant 1 : index
    %c0_12 = arith.constant 0 : index
    %23 = vector.load %arg5[%c1, %c0_12] : memref<2x256xf32, #tpu.memory_space<vmem>>, vector<1x256xf32>
    %24 = vector.broadcast %6 : vector<24x1xf32> to vector<24x256xf32>
    %25 = vector.broadcast %22 : vector<1x256xf32> to vector<24x256xf32>
    %26 = arith.mulf %24, %25 : vector<24x256xf32>
    %27 = vector.broadcast %7 : vector<24x1xf32> to vector<24x256xf32>
    %28 = vector.broadcast %23 : vector<1x256xf32> to vector<24x256xf32>
    %29 = arith.mulf %27, %28 : vector<24x256xf32>
    %30 = arith.addf %26, %29 : vector<24x256xf32>
    %cst_13 = arith.constant 2.000000e+00 : f32
    %31 = vector.broadcast %cst_13 : f32 to vector<24x256xf32>
    %32 = arith.mulf %21, %31 : vector<24x256xf32>
    %cst_14 = arith.constant 5.000000e-01 : f32
    %33 = vector.broadcast %cst_14 : f32 to vector<24x256xf32>
    %34 = arith.subf %32, %33 : vector<24x256xf32>
    %35 = arith.addf %34, %30 : vector<24x256xf32>
    %cst_15 = arith.constant 8.000000e+00 : f32
    %36 = vector.broadcast %cst_15 : f32 to vector<24x256xf32>
    %37 = arith.mulf %35, %36 : vector<24x256xf32>
    %cst_16 = arith.constant 2.000000e+00 : f32
    %38 = vector.broadcast %cst_16 : f32 to vector<24x256xf32>
    %39 = arith.mulf %21, %38 : vector<24x256xf32>
    %40 = arith.mulf %39, %39 : vector<24x256xf32>
    %41 = vector.broadcast %9 : vector<24x1xf32> to vector<24x256xf32>
    %42 = arith.mulf %40, %41 : vector<24x256xf32>
    %43 = vector.broadcast %10 : vector<24x1xf32> to vector<24x256xf32>
    %44 = arith.mulf %43, %37 : vector<24x256xf32>
    %45 = vector.broadcast %8 : vector<24x1xf32> to vector<24x256xf32>
    %46 = arith.mulf %45, %42 : vector<24x256xf32>
    %47 = arith.addf %44, %46 : vector<24x256xf32>
    %48 = vector.broadcast %11 : vector<24x1xf32> to vector<24x256xf32>
    %49 = arith.mulf %48, %21 : vector<24x256xf32>
    %50 = arith.addf %47, %49 : vector<24x256xf32>
    %c0_17 = arith.constant 0 : index
    %c0_18 = arith.constant 0 : index
    %c0_19 = arith.constant 0 : index
    %51 = vector.load %arg7[%c0_17, %c0_18, %c0_19] : memref<1x24x256xf32, #tpu.memory_space<vmem>>, vector<1x24x256xf32>
    %52 = vector.shape_cast %51 : vector<1x24x256xf32> to vector<24x256xf32>
    %53 = vector.shape_cast %50 : vector<24x256xf32> to vector<1x24x256xf32>
    tpu.vector_store %arg7[%c0_17, %c0_18, %c0_19], %53 {strides = array<i32>} : memref<1x24x256xf32, #tpu.memory_space<vmem>>, vector<1x24x256xf32>,
    return
  }
  func.func @transform_0(%arg0: i32, %arg1: i32) -> (i32, i32, i32) {
    %c0_i32 = arith.constant 0 : i32
    %c0_i32_0 = arith.constant 0 : i32
    return %arg0, %c0_i32, %arg1 : i32, i32, i32
  }
  func.func @transform_1(%arg0: i32, %arg1: i32) -> (i32, i32) {
    %c0_i32 = arith.constant 0 : i32
    %c0_i32_0 = arith.constant 0 : i32
    %c0_i32_1 = arith.constant 0 : i32
    return %c0_i32, %c0_i32_0 : i32, i32
  }
  func.func @transform_2(%arg0: i32, %arg1: i32) -> (i32, i32) {
    %c0_i32 = arith.constant 0 : i32
    %c0_i32_0 = arith.constant 0 : i32
    %c0_i32_1 = arith.constant 0 : i32
    return %c0_i32, %c0_i32_0 : i32, i32
  }
  func.func @transform_3(%arg0: i32, %arg1: i32) -> (i32, i32) {
    %c0_i32 = arith.constant 0 : i32
    %c0_i32_0 = arith.constant 0 : i32
    return %c0_i32, %arg1 : i32, i32
  }
  func.func @transform_4(%arg0: i32, %arg1: i32) -> (i32, i32, i32) {
    %c0_i32 = arith.constant 0 : i32
    %c0_i32_0 = arith.constant 0 : i32
    return %arg0, %c0_i32, %arg1 : i32, i32, i32
  }
  func.func @transform_5(%arg0: i32, %arg1: i32) -> (i32, i32, i32) {
    %c0_i32 = arith.constant 0 : i32
    %c0_i32_0 = arith.constant 0 : i32
    return %arg0, %c0_i32, %arg1 : i32, i32, i32
  }
}

</mosaic_0001>

<llo_original>
// kernel: idetect_forward.4
$region0: #{idetect_forward.4}
  #allocation0 [shape = 'u32[]', space=smem, size = 0x4, offset = 0x4, fixed_abs, tag = 'smem constant byte address 0x4 - core index']
  #allocation1 [shape = 'u32[144,128]{1,0:T(1,128)}', space=vmem, size = 0x12000, scoped, tag = 'internal scratch']
  %s0 = inlined_call_operand.vmem [shape: bf16[2,32,128], index: 0, kind: input, shape index: {}]
  %s1 = inlined_call_operand.vmem [shape: bf16[24,32], index: 1, kind: input, shape index: {}]
  %s2 = inlined_call_operand.vmem [shape: f32[24,8], index: 2, kind: input, shape index: {}]
  %s3 = inlined_call_operand.vmem [shape: f32[2,128], index: 3, kind: input, shape index: {}]
  %s4 = inlined_call_operand.vmem [shape: f32[2,24,128], index: 4, kind: output, shape index: {0}]
  %s5 = inlined_call_operand.vmem [shape: f32[2,24,128], index: 5, kind: output, shape index: {1}]
  %6 = xla_tuple %s4, %s5
  %s7 = sld [smem:[#allocation0]]
  $region57: #{idetect_forward.4} parent=0
    _
  %s9 = ssub.s32 1, %s7
  %s10 = scalar_select 0, %s9, %s7
  loop: start=0, step=1, limit=4
  $region2: #{idetect_forward.4} parent=0 // loop_pre_header
    _
  $region3: #{idetect_forward.4} parent=0 // loop_header
    %s12 = sphi 0, %s16
    %p13 = scmp.ge.s32.totalorder %s12, 4
    %s19 = sphi 0, %s31
    %s20 = sphi 0, %s27
    %s21 = sphi 0, %s19
    %s22 = sphi 0, %s20
    %s23 = sphi 0, %s21
    %s24 = sphi 0, %s22
    %s36 = sphi 0, %s38
    %s39 = sphi 0, %s36
    %s40 = sphi 0, %s39
    %s56 = sphi 0, %s40
    %s60 = sphi 0, %s60
    %s62 = sphi 0, %s60
    %s63 = sphi 0, %s62
    %s77 = sphi 0, %s63
    %s81 = sphi 0, %s81
    %s83 = sphi 0, %s81
    %s84 = sphi 0, %s83
    %s98 = sphi 0, %s84
    %s104 = sphi 0, %s106
    %s107 = sphi 0, %s104
    %s108 = sphi 0, %s107
    %s124 = sphi 0, %s108
    %s132 = sphi 0, %s134
    %s135 = sphi 0, %s132
    %s136 = sphi 0, %s135
    %s152 = sphi 0, %s136
    %s160 = sphi 0, %s162
    %s163 = sphi 0, %s160
    %s164 = sphi 0, %s163
    %s180 = sphi 0, %s164
  $region4: #{idetect_forward.4} parent=0 // loop_header_branch
    %15 = sbr.rel (%p13) target = $region8
  $region5: #{idetect_forward.4} parent=0 // loop_body
    %s17 = ssub.s32 %s12, 1
    %s18 = ssub.s32 %s12, 2
    %s25 = sadd.s32 1, %s20
    %p26 = scmp.ge.s32.totalorder %s25, 1
    %s27 = scalar_select %p26, 0, %s25
    %s28 = sadd.s32 1, %s19
    %s29 = scalar_select %p26, %s28, %s19
    %p30 = scmp.ge.s32.totalorder %s29, 2
    %s31 = scalar_select %p30, 0, %s29
    %s32 = ssub.s32 %s19, %s31
    %s33 = ssub.s32 %s20, %s27
    %s34 = sor.u32 %s32, %s33
    %p35 = scmp.eq.s32.totalorder %s34, 0
    %s37 = sadd.s32 %s36, 1
    %s38 = scalar_select %p35, %s36, %s37
    %p41 = pneg %p35
    %p42 = scmp.eq.s32.totalorder %s12, 1
    %p43 = por %p41, %p42
    %p44 = scmp.ne.s32.totalorder %s36, %s39
    %p45 = scmp.eq.s32.totalorder %s12, 0
    %p46 = por %p44, %p45
    %p47 = scmp.ne.s32.totalorder %s36, %s39
    %p48 = scmp.eq.s32.totalorder %s17, 1
    %p49 = por %p47, %p48
    %p50 = scmp.ne.s32.totalorder %s39, %s40
    %p51 = scmp.eq.s32.totalorder %s17, 0
    %p52 = por %p50, %p51
    %p53 = scmp.ne.s32.totalorder %s39, %s40
    %p54 = scmp.eq.s32.totalorder %s18, 1
    %p55 = por %p53, %p54
    %p57 = scmp.ne.s32.totalorder %s40, %s56
    %p58 = scmp.eq.s32.totalorder %s18, 0
    %p59 = por %p57, %p58
    %s61 = sadd.s32 %s60, 1
    %p64 = scmp.eq.s32.totalorder %s12, 1
    %p65 = scmp.ne.s32.totalorder %s60, %s62
    %p66 = scmp.eq.s32.totalorder %s12, 0
    %p67 = por %p65, %p66
    %p68 = scmp.ne.s32.totalorder %s60, %s62
    %p69 = scmp.eq.s32.totalorder %s17, 1
    %p70 = por %p68, %p69
    %p71 = scmp.ne.s32.totalorder %s62, %s63
    %p72 = scmp.eq.s32.totalorder %s17, 0
    %p73 = por %p71, %p72
    %p74 = scmp.ne.s32.totalorder %s62, %s63
    %p75 = scmp.eq.s32.totalorder %s18, 1
    %p76 = por %p74, %p75
    %p78 = scmp.ne.s32.totalorder %s63, %s77
    %p79 = scmp.eq.s32.totalorder %s18, 0
    %p80 = por %p78, %p79
    %s82 = sadd.s32 %s81, 1
    %p85 = scmp.eq.s32.totalorder %s12, 1
    %p86 = scmp.ne.s32.totalorder %s81, %s83
    %p87 = scmp.eq.s32.totalorder %s12, 0
    %p88 = por %p86, %p87
    %p89 = scmp.ne.s32.totalorder %s81, %s83
    %p90 = scmp.eq.s32.totalorder %s17, 1
    %p91 = por %p89, %p90
    %p92 = scmp.ne.s32.totalorder %s83, %s84
    %p93 = scmp.eq.s32.totalorder %s17, 0
    %p94 = por %p92, %p93
    %p95 = scmp.ne.s32.totalorder %s83, %s84
    %p96 = scmp.eq.s32.totalorder %s18, 1
    %p97 = por %p95, %p96
    %p99 = scmp.ne.s32.totalorder %s84, %s98
    %p100 = scmp.eq.s32.totalorder %s18, 0
    %p101 = por %p99, %p100
    %s102 = ssub.s32 %s20, %s27
    %p103 = scmp.eq.s32.totalorder %s102, 0
    %s105 = sadd.s32 %s104, 1
    %s106 = scalar_select %p103, %s104, %s105
    %p109 = pneg %p103
    %p110 = scmp.eq.s32.totalorder %s12, 1
    %p111 = por %p109, %p110
    %p112 = scmp.ne.s32.totalorder %s104, %s107
    %p113 = scmp.eq.s32.totalorder %s12, 0
    %p114 = por %p112, %p113
    %p115 = scmp.ne.s32.totalorder %s104, %s107
    %p116 = scmp.eq.s32.totalorder %s17, 1
    %p117 = por %p115, %p116
    %p118 = scmp.ne.s32.totalorder %s107, %s108
    %p119 = scmp.eq.s32.totalorder %s17, 0
    %p120 = por %p118, %p119
    %p121 = scmp.ne.s32.totalorder %s107, %s108
    %p122 = scmp.eq.s32.totalorder %s18, 1
    %p123 = por %p121, %p122
    %p125 = scmp.ne.s32.totalorder %s108, %s124
    %p126 = scmp.eq.s32.totalorder %s18, 0
    %p127 = por %p125, %p126
    %s128 = ssub.s32 %s19, %s31
    %s129 = ssub.s32 %s20, %s27
    %s130 = sor.u32 %s128, %s129
    %p131 = scmp.eq.s32.totalorder %s130, 0
    %s133 = sadd.s32 %s132, 1
    %s134 = scalar_select %p131, %s132, %s133
    %p137 = pneg %p131
    %p138 = scmp.eq.s32.totalorder %s12, 1
    %p139 = por %p137, %p138
    %p140 = scmp.ne.s32.totalorder %s132, %s135
    %p141 = scmp.eq.s32.totalorder %s12, 0
    %p142 = por %p140, %p141
    %p143 = scmp.ne.s32.totalorder %s132, %s135
    %p144 = scmp.eq.s32.totalorder %s17, 1
    %p145 = por %p143, %p144
    %p146 = scmp.ne.s32.totalorder %s135, %s136
    %p147 = scmp.eq.s32.totalorder %s17, 0
    %p148 = por %p146, %p147
    %p149 = scmp.ne.s32.totalorder %s135, %s136
    %p150 = scmp.eq.s32.totalorder %s18, 1
    %p151 = por %p149, %p150
    %p153 = scmp.ne.s32.totalorder %s136, %s152
    %p154 = scmp.eq.s32.totalorder %s18, 0
    %p155 = por %p153, %p154
    %s156 = ssub.s32 %s19, %s31
    %s157 = ssub.s32 %s20, %s27
    %s158 = sor.u32 %s156, %s157
    %p159 = scmp.eq.s32.totalorder %s158, 0
    %s161 = sadd.s32 %s160, 1
    %s162 = scalar_select %p159, %s160, %s161
    %p165 = pneg %p159
    %p166 = scmp.eq.s32.totalorder %s12, 1
    %p167 = por %p165, %p166
    %p168 = scmp.ne.s32.totalorder %s160, %s163
    %p169 = scmp.eq.s32.totalorder %s12, 0
    %p170 = por %p168, %p169
    %p171 = scmp.ne.s32.totalorder %s160, %s163
    %p172 = scmp.eq.s32.totalorder %s17, 1
    %p173 = por %p171, %p172
    %p174 = scmp.ne.s32.totalorder %s163, %s164
    %p175 = scmp.eq.s32.totalorder %s17, 0
    %p176 = por %p174, %p175
    %p177 = scmp.ne.s32.totalorder %s163, %s164
    %p178 = scmp.eq.s32.totalorder %s18, 1
    %p179 = por %p177, %p178
    %p181 = scmp.ne.s32.totalorder %s164, %s180
    %p182 = scmp.eq.s32.totalorder %s18, 0
    %p183 = por %p181, %p182
    %p184 = scmp.le.s32.totalorder 1, %s12
    %p185 = scmp.lt.s32.totalorder %s12, 3
    %p186 = pnand %p184, %p185
    %p187 = pneg %p186
    // Predicated region
    $region9: #{idetect_forward.4} parent=5 // pred_check
      _
    $region10: #{idetect_forward.4} parent=5 // pred_check_branch
      %189 = sbr.rel (%p186) target = $region12
    $region11: #{idetect_forward.4} parent=5 // pred_region
      %s190 = ssub.s32 %s12, 1
      // Predicated region
      $region13: #{idetect_forward.4} parent=11 // pred_check
        %p191 = pneg %p73
      $region14: #{idetect_forward.4} parent=11 // pred_check_branch
        %193 = sbr.rel (%p191) target = $region16
      $region15: #{idetect_forward.4} parent=11 // pred_region
        _
      $region16: #{idetect_forward.4} parent=11 // pred_fallthru
        _
      // Predicated region
      $region17: #{idetect_forward.4} parent=11 // pred_check
        %p194 = pneg %p94
      $region18: #{idetect_forward.4} parent=11 // pred_check_branch
        %196 = sbr.rel (%p194) target = $region20
      $region19: #{idetect_forward.4} parent=11 // pred_region
        _
      $region20: #{idetect_forward.4} parent=11 // pred_fallthru
        _
      // Predicated region
      $region21: #{idetect_forward.4} parent=11 // pred_check
        %p197 = pneg %p120
      $region22: #{idetect_forward.4} parent=11 // pred_check_branch
        %199 = sbr.rel (%p197) target = $region24
      $region23: #{idetect_forward.4} parent=11 // pred_region
        %p200 = scmp.lt.s32.totalorder %s22, 0
        %s201 = scalar_select %p200, %s22, 0
        %s202 = smul.addr %s201, 2
        %s203 = scalar_lea.vmem %s3, %s202
      $region24: #{idetect_forward.4} parent=11 // pred_fallthru
        _
    $region12: #{idetect_forward.4} parent=5 // pred_fallthru
      _
    %p204 = scmp.lt.s32.totalorder %s12, 2
    // Predicated region
    $region25: #{idetect_forward.4} parent=5 // pred_check
      %p205 = pneg %p204
    $region26: #{idetect_forward.4} parent=5 // pred_check_branch
      %207 = sbr.rel (%p205) target = $region28
    $region27: #{idetect_forward.4} parent=5 // pred_region
      // Predicated region
      $region29: #{idetect_forward.4} parent=27 // pred_check
        %p208 = pneg %p46
      $region30: #{idetect_forward.4} parent=27 // pred_check_branch
        %210 = sbr.rel (%p208) target = $region32
      $region31: #{idetect_forward.4} parent=27 // pred_region
        %p211 = scmp.lt.s32.totalorder %s19, 1
        %s212 = scalar_select %p211, %s19, 1
        %p213 = scmp.lt.s32.totalorder %s20, 0
        %s214 = scalar_select %p213, %s20, 0
        %s215 = smul.addr %s212, 4
        %s216 = sadd.s32 %s214, %s215
        %s217 = smul.addr %s216, 4
        %s218 = scalar_lea.vmem %s0, %s217
      $region32: #{idetect_forward.4} parent=27 // pred_fallthru
        _
    $region28: #{idetect_forward.4} parent=5 // pred_fallthru
      _
    %p219 = scmp.le.s32.totalorder 1, %s12
    %p220 = scmp.lt.s32.totalorder %s12, 3
    %p221 = pnand %p219, %p220
    %p222 = pneg %p221
    // Predicated region
    $region33: #{idetect_forward.4} parent=5 // pred_check
      _
    $region34: #{idetect_forward.4} parent=5 // pred_check_branch
      %224 = sbr.rel (%p221) target = $region36
    $region35: #{idetect_forward.4} parent=5 // pred_region
      %s225 = ssub.s32 %s12, 1
      %p226 = scmp.lt.s32.totalorder %s21, 1
      %s227 = scalar_select %p226, %s21, 1
      %p228 = scmp.lt.s32.totalorder %s22, 0
      %s229 = scalar_select %p228, %s22, 0
      %s230 = smul.addr %s227, 4
      %s231 = sadd.s32 %s229, %s230
      %s232 = smul.addr %s231, 4
      %s233 = scalar_lea.vmem %s0, %s232
      %p234 = pneg %p52
      %p235 = pneg %p49
      %p236 = pneg %p73
      %p237 = pneg %p70
      %p238 = pneg %p94
      %p239 = pneg %p91
      %p240 = scmp.lt.s32.totalorder %s22, 0
      %s241 = scalar_select %p240, %s22, 0
      %s242 = smul.addr %s241, 2
      %s243 = scalar_lea.vmem %s3, %s242
      %p244 = pneg %p120
      %p245 = pneg %p117
      %p246 = pneg %p148
      %p247 = pneg %p145
      %p248 = scmp.lt.s32.totalorder %s21, 1
      %s249 = scalar_select %p248, %s21, 1
      %p250 = scmp.lt.s32.totalorder %s22, 0
      %s251 = scalar_select %p250, %s22, 0
      %s252 = smul.addr %s249, 3
      %s253 = sadd.s32 %s251, %s252
      %s254 = smul.addr %s253, 8
      %s255 = scalar_lea.vmem %s4, %s254
      %p256 = pneg %p176
      %p257 = pneg %p173
      %p258 = scmp.lt.s32.totalorder %s21, 1
      %s259 = scalar_select %p258, %s21, 1
      %p260 = scmp.lt.s32.totalorder %s22, 0
      %s261 = scalar_select %p260, %s22, 0
      %s262 = smul.addr %s259, 3
      %s263 = sadd.s32 %s261, %s262
      %s264 = smul.addr %s263, 8
      %s265 = scalar_lea.vmem %s5, %s264
      %p266 = scmp.lt.s32.totalorder %s21, 1
      %s267 = scalar_select %p266, %s21, 1
      %p268 = scmp.lt.s32.totalorder %s22, 0
      %s269 = scalar_select %p268, %s22, 0
      %s270 = smul.addr %s267, 4
      %s271 = sadd.s32 %s269, %s270
      %s272 = smul.addr %s271, 4
      %s273 = scalar_lea.vmem %s0, %s272
      %p274 = scmp.lt.s32.totalorder %s22, 0
      %s275 = scalar_select %p274, %s22, 0
      %s276 = smul.addr %s275, 2
      %s277 = scalar_lea.vmem %s3, %s276
      %p278 = scmp.lt.s32.totalorder %s21, 1
      %s279 = scalar_select %p278, %s21, 1
      %p280 = scmp.lt.s32.totalorder %s22, 0
      %s281 = scalar_select %p280, %s22, 0
      %s282 = smul.addr %s279, 3
      %s283 = sadd.s32 %s281, %s282
      %s284 = smul.addr %s283, 8
      %s285 = scalar_lea.vmem %s4, %s284
      %p286 = scmp.lt.s32.totalorder %s21, 1
      %s287 = scalar_select %p286, %s21, 1
      %p288 = scmp.lt.s32.totalorder %s22, 0
      %s289 = scalar_select %p288, %s22, 0
      %s290 = smul.addr %s287, 3
      %s291 = sadd.s32 %s289, %s290
      %s292 = smul.addr %s291, 8
      %s293 = scalar_lea.vmem %s5, %s292
      %v295 = vld [vmem:[%s1] sm:$0xf]
      %v296 = vld [vmem:[%s1 + $0x4] sm:$0xf]
      %v297 = vld [vmem:[%s1 + $0x8] sm:$0xf]
      %v298 = vld [vmem:[%s273] sm:$0xf]
      %v299 = vld [vmem:[%s273 + $0x4] sm:$0xf]
      %v300 = vld [vmem:[%s273 + $0x8] sm:$0xf]
      %v301 = vld [vmem:[%s273 + $0xc] sm:$0xf]
      %v302 = vld [vmem:[%s2] sm:$0xff]
      %v303 = vld [vmem:[%s2 + $0x8] sm:$0xff]
      %v304 = vld [vmem:[%s2 + $0x10] sm:$0xff]
      %306 = vset.pattern.permute.xlu0 0
      %307 = vperm.xlu0 %306, %v302
      %v308 = vpop.permute.xlu0 %307
      %311 = vset.pattern.permute.xlu0 0
      %312 = vperm.xlu0 %311, %v303
      %v313 = vpop.permute.xlu0 %312
      %316 = vset.pattern.permute.xlu0 0
      %317 = vperm.xlu0 %316, %v304
      %v318 = vpop.permute.xlu0 %317
      %v323 = vunpack.c.l.b16 %v295
      %v324 = vunpack.c.l.b16 %v296
      %v325 = vunpack.c.l.b16 %v297
      %v326 = vpack.c.b16 %v324, %v323
      %v327 = vpack.c.b16 %v325, %v325
      %v332 = vunpack.c.l.b16 %v298
      %v333 = vunpack.c.l.b16 %v299
      %v334 = vunpack.c.l.b16 %v300
      %v335 = vunpack.c.l.b16 %v301
      %v336 = vpack.c.b16 %v333, %v332
      %v337 = vpack.c.b16 %v335, %v334
      %vm340 = vcmask 261120
      %v342 = vsel %vm340, %v326, 0
      %v345 = vsel %vm340, %v327, 0
      %347 = vmatprep.subr.bf16.mxu0 0
      %348 = vmatpush1.bf16.msra.mxu0 0
      %349 = vmatprep.subr.bf16.mxu0 0
      %350 = vmatpush1.bf16.msra.mxu0 0
      %351 = vmatprep.subr.bf16.mxu0 0
      %352 = vmatpush1.bf16.msra.mxu0 0
      %353 = vmatprep.subr.bf16.mxu0 0
      %354 = vmatpush1.bf16.msra.mxu0 0
      %355 = vmatprep.subr.bf16.mxu0 0
      %356 = vmatpush1.bf16.msra.mxu0 0
      %357 = vmatprep.subr.bf16.mxu0 0
      %358 = vmatpush1.bf16.msra.mxu0 0
      %359 = vmatprep.subr.bf16.mxu0 0
      %360 = vmatpush1.bf16.msra.mxu0 %v337
      %361 = vmatprep.subr.bf16.mxu0 0
      %362 = vmatpush1.bf16.msra.mxu0 %v336
      %363 = vmatprep.subr.bf16.mxu0 0
      %364 = vmatpush2.bf16.msra.mxu0 0
      %365 = vmatprep.subr.bf16.mxu0 0
      %366 = vmatpush2.bf16.msra.mxu0 0
      %367 = vmatprep.subr.bf16.mxu0 0
      %368 = vmatpush2.bf16.msra.mxu0 0
      %369 = vmatprep.subr.bf16.mxu0 0
      %370 = vmatpush2.bf16.msra.mxu0 0
      %371 = vmatprep.subr.bf16.mxu0 0
      %372 = vmatpush2.bf16.msra.mxu0 0
      %373 = vmatprep.subr.bf16.mxu0 0
      %374 = vmatpush2.bf16.msra.mxu0 0
      %375 = vmatprep.subr.bf16.mxu0 0
      %376 = vmatpush2.bf16.msra.mxu0 0
      %377 = vmatprep.subr.bf16.mxu0 0
      %378 = vmatpush2.bf16.msra.mxu0 0
      %379 = vmatprep.mubr.bf16.mxu0 0
      %380 = vmatmul.mubr.bf16.gmra.mxu0 %v342
      %v381 = vpop.f32.mrf.mxu0
      %v382 = vadd.f32 %v308, %v381
      %v383 = vpop.f32.mrf.mxu0
      %v384 = vpop.f32.mrf.mxu0
      %v385 = vadd.f32 %v313, %v384
      %v386 = vpop.f32.mrf.mxu0
      %387 = vmatprep.mubr.bf16.mxu0 0
      %388 = vmatmul.mubr.bf16.gmra.mxu0 %v345
      %v389 = vpop.f32.mrf.mxu0
      %v390 = vadd.f32 %v318, %v389
      %v391 = vpop.f32.mrf.mxu0
      %v392 = vpop.f32.mrf.mxu0
      %v393 = vpop.f32.mrf.mxu0
      %394 = vdwg.mxu0
      %395 = vst [vmem:[%s285] sm:$0xff] %v382
      %396 = vst [vmem:[%s285 + $0x8] sm:$0xff] %v385
      %397 = vst [vmem:[%s285 + $0x10] sm:$0xff] %v390
      %v398 = vxor.u32 %v382, 2147483648
      %v399 = vxor.u32 %v385, 2147483648
      %v400 = vxor.u32 %v390, 2147483648
      %v401 = vmul.f32 %v398, 1.442695
      %v402 = vpow.pop %v401
      %v403 = vmul.f32 %v399, 1.442695
      %v404 = vpow.pop %v403
      %v405 = vmul.f32 %v400, 1.442695
      %v406 = vpow.pop %v405
      %v407 = vadd.f32 %v402, 1.0
      %v408 = vadd.f32 %v404, 1.0
      %v409 = vadd.f32 %v406, 1.0
      %v410 = vrcp.pop %v407
      %v411 = vmul.f32 1.0, %v410
      %v412 = vrcp.pop %v408
      %v413 = vmul.f32 1.0, %v412
      %v414 = vrcp.pop %v409
      %v415 = vmul.f32 1.0, %v414
      %v416 = vld [vmem:[%s277] sm:$0x1]
      %v417 = vld [vmem:[%s277 + $0x1] sm:$0x1]
      %418 = vset.pattern.permute.xlu0 1
      %419 = vperm.xlu0 %418, %v302
      %v420 = vpop.permute.xlu0 %419
      %422 = vset.pattern.permute.xlu0 1
      %423 = vperm.xlu0 %422, %v303
      %v424 = vpop.permute.xlu0 %423
      %426 = vset.pattern.permute.xlu0 1
      %427 = vperm.xlu0 %426, %v304
      %v428 = vpop.permute.xlu0 %427
      %v430 = vlaneseq
      %v431 = vshrl.u32 %v430, 7
      %v432 = vsub.s32 0, %v431
      %v433 = vrot.slane %v416, %v432
      %v434 = vmul.f32 %v420, %v433
      %v435 = vmul.f32 %v424, %v433
      %v436 = vmul.f32 %v428, %v433
      %437 = vset.pattern.permute.xlu0 2
      %438 = vperm.xlu0 %437, %v302
      %v439 = vpop.permute.xlu0 %438
      %441 = vset.pattern.permute.xlu0 2
      %442 = vperm.xlu0 %441, %v303
      %v443 = vpop.permute.xlu0 %442
      %445 = vset.pattern.permute.xlu0 2
      %446 = vperm.xlu0 %445, %v304
      %v447 = vpop.permute.xlu0 %446
      %v449 = vlaneseq
      %v450 = vshrl.u32 %v449, 7
      %v451 = vsub.s32 0, %v450
      %v452 = vrot.slane %v417, %v451
      %v453 = vmul.f32 %v439, %v452
      %v454 = vmul.f32 %v443, %v452
      %v455 = vmul.f32 %v447, %v452
      %v456 = vadd.f32 %v434, %v453
      %v457 = vadd.f32 %v435, %v454
      %v458 = vadd.f32 %v436, %v455
      %v459 = vmul.f32 %v411, 2.0
      %v460 = vmul.f32 %v413, 2.0
      %v461 = vmul.f32 %v415, 2.0
      %v462 = vsub.f32 %v459, 0.5
      %v463 = vsub.f32 %v460, 0.5
      %v464 = vsub.f32 %v461, 0.5
      %v465 = vadd.f32 %v462, %v456
      %v466 = vadd.f32 %v463, %v457
      %v467 = vadd.f32 %v464, %v458
      %v468 = vmul.f32 %v465, 16.0
      %v469 = vmul.f32 %v466, 16.0
      %v470 = vmul.f32 %v467, 16.0
      %v471 = vmul.f32 %v459, %v459
      %v472 = vmul.f32 %v460, %v460
      %v473 = vmul.f32 %v461, %v461
      %474 = vset.pattern.permute.xlu0 4
      %475 = vperm.xlu0 %474, %v302
      %v476 = vpop.permute.xlu0 %475
      %478 = vset.pattern.permute.xlu0 4
      %479 = vperm.xlu0 %478, %v303
      %v480 = vpop.permute.xlu0 %479
      %482 = vset.pattern.permute.xlu0 4
      %483 = vperm.xlu0 %482, %v304
      %v484 = vpop.permute.xlu0 %483
      %v486 = vmul.f32 %v471, %v476
      %v487 = vmul.f32 %v472, %v480
      %v488 = vmul.f32 %v473, %v484
      %489 = vset.pattern.permute.xlu0 5
      %490 = vperm.xlu0 %489, %v302
      %v491 = vpop.permute.xlu0 %490
      %493 = vset.pattern.permute.xlu0 5
      %494 = vperm.xlu0 %493, %v303
      %v495 = vpop.permute.xlu0 %494
      %497 = vset.pattern.permute.xlu0 5
      %498 = vperm.xlu0 %497, %v304
      %v499 = vpop.permute.xlu0 %498
      %v501 = vmul.f32 %v491, %v468
      %v502 = vmul.f32 %v495, %v469
      %v503 = vmul.f32 %v499, %v470
      %504 = vset.pattern.permute.xlu0 3
      %505 = vperm.xlu0 %504, %v302
      %v506 = vpop.permute.xlu0 %505
      %508 = vset.pattern.permute.xlu0 3
      %509 = vperm.xlu0 %508, %v303
      %v510 = vpop.permute.xlu0 %509
      %512 = vset.pattern.permute.xlu0 3
      %513 = vperm.xlu0 %512, %v304
      %v514 = vpop.permute.xlu0 %513
      %v516 = vmul.f32 %v506, %v486
      %v517 = vmul.f32 %v510, %v487
      %v518 = vmul.f32 %v514, %v488
      %v519 = vadd.f32 %v501, %v516
      %v520 = vadd.f32 %v502, %v517
      %v521 = vadd.f32 %v503, %v518
      %522 = vset.pattern.permute.xlu0 6
      %523 = vperm.xlu0 %522, %v302
      %v524 = vpop.permute.xlu0 %523
      %526 = vset.pattern.permute.xlu0 6
      %527 = vperm.xlu0 %526, %v303
      %v528 = vpop.permute.xlu0 %527
      %530 = vset.pattern.permute.xlu0 6
      %531 = vperm.xlu0 %530, %v304
      %v532 = vpop.permute.xlu0 %531
      %v534 = vmul.f32 %v524, %v411
      %v535 = vmul.f32 %v528, %v413
      %v536 = vmul.f32 %v532, %v415
      %v537 = vadd.f32 %v519, %v534
      %v538 = vadd.f32 %v520, %v535
      %v539 = vadd.f32 %v521, %v536
      %540 = vst [vmem:[%s293] sm:$0xff] %v537
      %541 = vst [vmem:[%s293 + $0x8] sm:$0xff] %v538
      %542 = vst [vmem:[%s293 + $0x10] sm:$0xff] %v539
      %p543 = scmp.lt.s32.totalorder %s21, 1
      %s544 = scalar_select %p543, %s21, 1
      %p545 = scmp.lt.s32.totalorder %s22, 0
      %s546 = scalar_select %p545, %s22, 0
      %s547 = smul.addr %s544, 3
      %s548 = sadd.s32 %s546, %s547
      %s549 = smul.addr %s548, 8
      %s550 = scalar_lea.vmem %s4, %s549
      %p551 = scmp.lt.s32.totalorder %s21, 1
      %s552 = scalar_select %p551, %s21, 1
      %p553 = scmp.lt.s32.totalorder %s22, 0
      %s554 = scalar_select %p553, %s22, 0
      %s555 = smul.addr %s552, 3
      %s556 = sadd.s32 %s554, %s555
      %s557 = smul.addr %s556, 8
      %s558 = scalar_lea.vmem %s5, %s557
      // Predicated region
      $region37: #{idetect_forward.4} parent=35 // pred_check
        %p559 = pneg %p145
      $region38: #{idetect_forward.4} parent=35 // pred_check_branch
        %561 = sbr.rel (%p559) target = $region40
      $region39: #{idetect_forward.4} parent=35 // pred_region
        _
      $region40: #{idetect_forward.4} parent=35 // pred_fallthru
        _
      // Predicated region
      $region41: #{idetect_forward.4} parent=35 // pred_check
        %p562 = pneg %p173
      $region42: #{idetect_forward.4} parent=35 // pred_check_branch
        %564 = sbr.rel (%p562) target = $region44
      $region43: #{idetect_forward.4} parent=35 // pred_region
        _
      $region44: #{idetect_forward.4} parent=35 // pred_fallthru
        _
    $region36: #{idetect_forward.4} parent=5 // pred_fallthru
      _
    %p565 = scmp.le.s32.totalorder 2, %s12
    // Predicated region
    $region45: #{idetect_forward.4} parent=5 // pred_check
      %p566 = pneg %p565
    $region46: #{idetect_forward.4} parent=5 // pred_check_branch
      %568 = sbr.rel (%p566) target = $region48
    $region47: #{idetect_forward.4} parent=5 // pred_region
      %s569 = ssub.s32 %s12, 2
      // Predicated region
      $region49: #{idetect_forward.4} parent=47 // pred_check
        %p570 = pneg %p151
      $region50: #{idetect_forward.4} parent=47 // pred_check_branch
        %572 = sbr.rel (%p570) target = $region52
      $region51: #{idetect_forward.4} parent=47 // pred_region
        %p573 = scmp.lt.s32.totalorder %s23, 1
        %s574 = scalar_select %p573, %s23, 1
        %p575 = scmp.lt.s32.totalorder %s24, 0
        %s576 = scalar_select %p575, %s24, 0
        %s577 = smul.addr %s574, 3
        %s578 = sadd.s32 %s576, %s577
        %s579 = smul.addr %s578, 8
        %s580 = scalar_lea.vmem %s4, %s579
      $region52: #{idetect_forward.4} parent=47 // pred_fallthru
        _
      // Predicated region
      $region53: #{idetect_forward.4} parent=47 // pred_check
        %p581 = pneg %p179
      $region54: #{idetect_forward.4} parent=47 // pred_check_branch
        %583 = sbr.rel (%p581) target = $region56
      $region55: #{idetect_forward.4} parent=47 // pred_region
        %p584 = scmp.lt.s32.totalorder %s23, 1
        %s585 = scalar_select %p584, %s23, 1
        %p586 = scmp.lt.s32.totalorder %s24, 0
        %s587 = scalar_select %p586, %s24, 0
        %s588 = smul.addr %s585, 3
        %s589 = sadd.s32 %s587, %s588
        %s590 = smul.addr %s589, 8
        %s591 = scalar_lea.vmem %s5, %s590
      $region56: #{idetect_forward.4} parent=47 // pred_fallthru
        _
    $region48: #{idetect_forward.4} parent=5 // pred_fallthru
      _
  $region6: #{idetect_forward.4} parent=0 // loop_footer
    %s16 = sadd.s32 1, %s12
  $region7: #{idetect_forward.4} parent=0 // loop_footer_branch
    %11 = sbr.rel target = $region3
  $region8: #{idetect_forward.4} parent=0 // loop_exit
    _

// kernel: idetect_forward.5
$region0: #{idetect_forward.5}
  #allocation0 [shape = 'u32[]', space=smem, size = 0x4, offset = 0x4, fixed_abs, tag = 'smem constant byte address 0x4 - core index']
  #allocation1 [shape = 'u32[144,128]{1,0:T(1,128)}', space=vmem, size = 0x12000, scoped, tag = 'internal scratch']
  %s0 = inlined_call_operand.vmem [shape: bf16[2,64,128], index: 0, kind: input, shape index: {}]
  %s1 = inlined_call_operand.vmem [shape: bf16[24,64], index: 1, kind: input, shape index: {}]
  %s2 = inlined_call_operand.vmem [shape: f32[24,8], index: 2, kind: input, shape index: {}]
  %s3 = inlined_call_operand.vmem [shape: f32[2,128], index: 3, kind: input, shape index: {}]
  %s4 = inlined_call_operand.vmem [shape: f32[2,24,128], index: 4, kind: output, shape index: {0}]
  %s5 = inlined_call_operand.vmem [shape: f32[2,24,128], index: 5, kind: output, shape index: {1}]
  %6 = xla_tuple %s4, %s5
  %s7 = sld [smem:[#allocation0]]
  $region57: #{idetect_forward.5} parent=0
    _
  %s9 = ssub.s32 1, %s7
  %s10 = scalar_select 0, %s9, %s7
  loop: start=0, step=1, limit=4
  $region2: #{idetect_forward.5} parent=0 // loop_pre_header
    _
  $region3: #{idetect_forward.5} parent=0 // loop_header
    %s12 = sphi 0, %s16
    %p13 = scmp.ge.s32.totalorder %s12, 4
    %s19 = sphi 0, %s31
    %s20 = sphi 0, %s27
    %s21 = sphi 0, %s19
    %s22 = sphi 0, %s20
    %s23 = sphi 0, %s21
    %s24 = sphi 0, %s22
    %s36 = sphi 0, %s38
    %s39 = sphi 0, %s36
    %s40 = sphi 0, %s39
    %s56 = sphi 0, %s40
    %s60 = sphi 0, %s60
    %s62 = sphi 0, %s60
    %s63 = sphi 0, %s62
    %s77 = sphi 0, %s63
    %s81 = sphi 0, %s81
    %s83 = sphi 0, %s81
    %s84 = sphi 0, %s83
    %s98 = sphi 0, %s84
    %s104 = sphi 0, %s106
    %s107 = sphi 0, %s104
    %s108 = sphi 0, %s107
    %s124 = sphi 0, %s108
    %s132 = sphi 0, %s134
    %s135 = sphi 0, %s132
    %s136 = sphi 0, %s135
    %s152 = sphi 0, %s136
    %s160 = sphi 0, %s162
    %s163 = sphi 0, %s160
    %s164 = sphi 0, %s163
    %s180 = sphi 0, %s164
  $region4: #{idetect_forward.5} parent=0 // loop_header_branch
    %15 = sbr.rel (%p13) target = $region8
  $region5: #{idetect_forward.5} parent=0 // loop_body
    %s17 = ssub.s32 %s12, 1
    %s18 = ssub.s32 %s12, 2
    %s25 = sadd.s32 1, %s20
    %p26 = scmp.ge.s32.totalorder %s25, 1
    %s27 = scalar_select %p26, 0, %s25
    %s28 = sadd.s32 1, %s19
    %s29 = scalar_select %p26, %s28, %s19
    %p30 = scmp.ge.s32.totalorder %s29, 2
    %s31 = scalar_select %p30, 0, %s29
    %s32 = ssub.s32 %s19, %s31
    %s33 = ssub.s32 %s20, %s27
    %s34 = sor.u32 %s32, %s33
    %p35 = scmp.eq.s32.totalorder %s34, 0
    %s37 = sadd.s32 %s36, 1
    %s38 = scalar_select %p35, %s36, %s37
    %p41 = pneg %p35
    %p42 = scmp.eq.s32.totalorder %s12, 1
    %p43 = por %p41, %p42
    %p44 = scmp.ne.s32.totalorder %s36, %s39
    %p45 = scmp.eq.s32.totalorder %s12, 0
    %p46 = por %p44, %p45
    %p47 = scmp.ne.s32.totalorder %s36, %s39
    %p48 = scmp.eq.s32.totalorder %s17, 1
    %p49 = por %p47, %p48
    %p50 = scmp.ne.s32.totalorder %s39, %s40
    %p51 = scmp.eq.s32.totalorder %s17, 0
    %p52 = por %p50, %p51
    %p53 = scmp.ne.s32.totalorder %s39, %s40
    %p54 = scmp.eq.s32.totalorder %s18, 1
    %p55 = por %p53, %p54
    %p57 = scmp.ne.s32.totalorder %s40, %s56
    %p58 = scmp.eq.s32.totalorder %s18, 0
    %p59 = por %p57, %p58
    %s61 = sadd.s32 %s60, 1
    %p64 = scmp.eq.s32.totalorder %s12, 1
    %p65 = scmp.ne.s32.totalorder %s60, %s62
    %p66 = scmp.eq.s32.totalorder %s12, 0
    %p67 = por %p65, %p66
    %p68 = scmp.ne.s32.totalorder %s60, %s62
    %p69 = scmp.eq.s32.totalorder %s17, 1
    %p70 = por %p68, %p69
    %p71 = scmp.ne.s32.totalorder %s62, %s63
    %p72 = scmp.eq.s32.totalorder %s17, 0
    %p73 = por %p71, %p72
    %p74 = scmp.ne.s32.totalorder %s62, %s63
    %p75 = scmp.eq.s32.totalorder %s18, 1
    %p76 = por %p74, %p75
    %p78 = scmp.ne.s32.totalorder %s63, %s77
    %p79 = scmp.eq.s32.totalorder %s18, 0
    %p80 = por %p78, %p79
    %s82 = sadd.s32 %s81, 1
    %p85 = scmp.eq.s32.totalorder %s12, 1
    %p86 = scmp.ne.s32.totalorder %s81, %s83
    %p87 = scmp.eq.s32.totalorder %s12, 0
    %p88 = por %p86, %p87
    %p89 = scmp.ne.s32.totalorder %s81, %s83
    %p90 = scmp.eq.s32.totalorder %s17, 1
    %p91 = por %p89, %p90
    %p92 = scmp.ne.s32.totalorder %s83, %s84
    %p93 = scmp.eq.s32.totalorder %s17, 0
    %p94 = por %p92, %p93
    %p95 = scmp.ne.s32.totalorder %s83, %s84
    %p96 = scmp.eq.s32.totalorder %s18, 1
    %p97 = por %p95, %p96
    %p99 = scmp.ne.s32.totalorder %s84, %s98
    %p100 = scmp.eq.s32.totalorder %s18, 0
    %p101 = por %p99, %p100
    %s102 = ssub.s32 %s20, %s27
    %p103 = scmp.eq.s32.totalorder %s102, 0
    %s105 = sadd.s32 %s104, 1
    %s106 = scalar_select %p103, %s104, %s105
    %p109 = pneg %p103
    %p110 = scmp.eq.s32.totalorder %s12, 1
    %p111 = por %p109, %p110
    %p112 = scmp.ne.s32.totalorder %s104, %s107
    %p113 = scmp.eq.s32.totalorder %s12, 0
    %p114 = por %p112, %p113
    %p115 = scmp.ne.s32.totalorder %s104, %s107
    %p116 = scmp.eq.s32.totalorder %s17, 1
    %p117 = por %p115, %p116
    %p118 = scmp.ne.s32.totalorder %s107, %s108
    %p119 = scmp.eq.s32.totalorder %s17, 0
    %p120 = por %p118, %p119
    %p121 = scmp.ne.s32.totalorder %s107, %s108
    %p122 = scmp.eq.s32.totalorder %s18, 1
    %p123 = por %p121, %p122
    %p125 = scmp.ne.s32.totalorder %s108, %s124
    %p126 = scmp.eq.s32.totalorder %s18, 0
    %p127 = por %p125, %p126
    %s128 = ssub.s32 %s19, %s31
    %s129 = ssub.s32 %s20, %s27
    %s130 = sor.u32 %s128, %s129
    %p131 = scmp.eq.s32.totalorder %s130, 0
    %s133 = sadd.s32 %s132, 1
    %s134 = scalar_select %p131, %s132, %s133
    %p137 = pneg %p131
    %p138 = scmp.eq.s32.totalorder %s12, 1
    %p139 = por %p137, %p138
    %p140 = scmp.ne.s32.totalorder %s132, %s135
    %p141 = scmp.eq.s32.totalorder %s12, 0
    %p142 = por %p140, %p141
    %p143 = scmp.ne.s32.totalorder %s132, %s135
    %p144 = scmp.eq.s32.totalorder %s17, 1
    %p145 = por %p143, %p144
    %p146 = scmp.ne.s32.totalorder %s135, %s136
    %p147 = scmp.eq.s32.totalorder %s17, 0
    %p148 = por %p146, %p147
    %p149 = scmp.ne.s32.totalorder %s135, %s136
    %p150 = scmp.eq.s32.totalorder %s18, 1
    %p151 = por %p149, %p150
    %p153 = scmp.ne.s32.totalorder %s136, %s152
    %p154 = scmp.eq.s32.totalorder %s18, 0
    %p155 = por %p153, %p154
    %s156 = ssub.s32 %s19, %s31
    %s157 = ssub.s32 %s20, %s27
    %s158 = sor.u32 %s156, %s157
    %p159 = scmp.eq.s32.totalorder %s158, 0
    %s161 = sadd.s32 %s160, 1
    %s162 = scalar_select %p159, %s160, %s161
    %p165 = pneg %p159
    %p166 = scmp.eq.s32.totalorder %s12, 1
    %p167 = por %p165, %p166
    %p168 = scmp.ne.s32.totalorder %s160, %s163
    %p169 = scmp.eq.s32.totalorder %s12, 0
    %p170 = por %p168, %p169
    %p171 = scmp.ne.s32.totalorder %s160, %s163
    %p172 = scmp.eq.s32.totalorder %s17, 1
    %p173 = por %p171, %p172
    %p174 = scmp.ne.s32.totalorder %s163, %s164
    %p175 = scmp.eq.s32.totalorder %s17, 0
    %p176 = por %p174, %p175
    %p177 = scmp.ne.s32.totalorder %s163, %s164
    %p178 = scmp.eq.s32.totalorder %s18, 1
    %p179 = por %p177, %p178
    %p181 = scmp.ne.s32.totalorder %s164, %s180
    %p182 = scmp.eq.s32.totalorder %s18, 0
    %p183 = por %p181, %p182
    %p184 = scmp.le.s32.totalorder 1, %s12
    %p185 = scmp.lt.s32.totalorder %s12, 3
    %p186 = pnand %p184, %p185
    %p187 = pneg %p186
    // Predicated region
    $region9: #{idetect_forward.5} parent=5 // pred_check
      _
    $region10: #{idetect_forward.5} parent=5 // pred_check_branch
      %189 = sbr.rel (%p186) target = $region12
    $region11: #{idetect_forward.5} parent=5 // pred_region
      %s190 = ssub.s32 %s12, 1
      // Predicated region
      $region13: #{idetect_forward.5} parent=11 // pred_check
        %p191 = pneg %p73
      $region14: #{idetect_forward.5} parent=11 // pred_check_branch
        %193 = sbr.rel (%p191) target = $region16
      $region15: #{idetect_forward.5} parent=11 // pred_region
        _
      $region16: #{idetect_forward.5} parent=11 // pred_fallthru
        _
      // Predicated region
      $region17: #{idetect_forward.5} parent=11 // pred_check
        %p194 = pneg %p94
      $region18: #{idetect_forward.5} parent=11 // pred_check_branch
        %196 = sbr.rel (%p194) target = $region20
      $region19: #{idetect_forward.5} parent=11 // pred_region
        _
      $region20: #{idetect_forward.5} parent=11 // pred_fallthru
        _
      // Predicated region
      $region21: #{idetect_forward.5} parent=11 // pred_check
        %p197 = pneg %p120
      $region22: #{idetect_forward.5} parent=11 // pred_check_branch
        %199 = sbr.rel (%p197) target = $region24
      $region23: #{idetect_forward.5} parent=11 // pred_region
        %p200 = scmp.lt.s32.totalorder %s22, 0
        %s201 = scalar_select %p200, %s22, 0
        %s202 = smul.addr %s201, 2
        %s203 = scalar_lea.vmem %s3, %s202
      $region24: #{idetect_forward.5} parent=11 // pred_fallthru
        _
    $region12: #{idetect_forward.5} parent=5 // pred_fallthru
      _
    %p204 = scmp.lt.s32.totalorder %s12, 2
    // Predicated region
    $region25: #{idetect_forward.5} parent=5 // pred_check
      %p205 = pneg %p204
    $region26: #{idetect_forward.5} parent=5 // pred_check_branch
      %207 = sbr.rel (%p205) target = $region28
    $region27: #{idetect_forward.5} parent=5 // pred_region
      // Predicated region
      $region29: #{idetect_forward.5} parent=27 // pred_check
        %p208 = pneg %p46
      $region30: #{idetect_forward.5} parent=27 // pred_check_branch
        %210 = sbr.rel (%p208) target = $region32
      $region31: #{idetect_forward.5} parent=27 // pred_region
        %p211 = scmp.lt.s32.totalorder %s19, 1
        %s212 = scalar_select %p211, %s19, 1
        %p213 = scmp.lt.s32.totalorder %s20, 0
        %s214 = scalar_select %p213, %s20, 0
        %s215 = smul.addr %s212, 8
        %s216 = sadd.s32 %s214, %s215
        %s217 = smul.addr %s216, 4
        %s218 = scalar_lea.vmem %s0, %s217
      $region32: #{idetect_forward.5} parent=27 // pred_fallthru
        _
    $region28: #{idetect_forward.5} parent=5 // pred_fallthru
      _
    %p219 = scmp.le.s32.totalorder 1, %s12
    %p220 = scmp.lt.s32.totalorder %s12, 3
    %p221 = pnand %p219, %p220
    %p222 = pneg %p221
    // Predicated region
    $region33: #{idetect_forward.5} parent=5 // pred_check
      _
    $region34: #{idetect_forward.5} parent=5 // pred_check_branch
      %224 = sbr.rel (%p221) target = $region36
    $region35: #{idetect_forward.5} parent=5 // pred_region
      %s225 = ssub.s32 %s12, 1
      %p226 = scmp.lt.s32.totalorder %s21, 1
      %s227 = scalar_select %p226, %s21, 1
      %p228 = scmp.lt.s32.totalorder %s22, 0
      %s229 = scalar_select %p228, %s22, 0
      %s230 = smul.addr %s227, 8
      %s231 = sadd.s32 %s229, %s230
      %s232 = smul.addr %s231, 4
      %s233 = scalar_lea.vmem %s0, %s232
      %p234 = pneg %p52
      %p235 = pneg %p49
      %p236 = pneg %p73
      %p237 = pneg %p70
      %p238 = pneg %p94
      %p239 = pneg %p91
      %p240 = scmp.lt.s32.totalorder %s22, 0
      %s241 = scalar_select %p240, %s22, 0
      %s242 = smul.addr %s241, 2
      %s243 = scalar_lea.vmem %s3, %s242
      %p244 = pneg %p120
      %p245 = pneg %p117
      %p246 = pneg %p148
      %p247 = pneg %p145
      %p248 = scmp.lt.s32.totalorder %s21, 1
      %s249 = scalar_select %p248, %s21, 1
      %p250 = scmp.lt.s32.totalorder %s22, 0
      %s251 = scalar_select %p250, %s22, 0
      %s252 = smul.addr %s249, 3
      %s253 = sadd.s32 %s251, %s252
      %s254 = smul.addr %s253, 8
      %s255 = scalar_lea.vmem %s4, %s254
      %p256 = pneg %p176
      %p257 = pneg %p173
      %p258 = scmp.lt.s32.totalorder %s21, 1
      %s259 = scalar_select %p258, %s21, 1
      %p260 = scmp.lt.s32.totalorder %s22, 0
      %s261 = scalar_select %p260, %s22, 0
      %s262 = smul.addr %s259, 3
      %s263 = sadd.s32 %s261, %s262
      %s264 = smul.addr %s263, 8
      %s265 = scalar_lea.vmem %s5, %s264
      %p266 = scmp.lt.s32.totalorder %s21, 1
      %s267 = scalar_select %p266, %s21, 1
      %p268 = scmp.lt.s32.totalorder %s22, 0
      %s269 = scalar_select %p268, %s22, 0
      %s270 = smul.addr %s267, 8
      %s271 = sadd.s32 %s269, %s270
      %s272 = smul.addr %s271, 4
      %s273 = scalar_lea.vmem %s0, %s272
      %p274 = scmp.lt.s32.totalorder %s22, 0
      %s275 = scalar_select %p274, %s22, 0
      %s276 = smul.addr %s275, 2
      %s277 = scalar_lea.vmem %s3, %s276
      %p278 = scmp.lt.s32.totalorder %s21, 1
      %s279 = scalar_select %p278, %s21, 1
      %p280 = scmp.lt.s32.totalorder %s22, 0
      %s281 = scalar_select %p280, %s22, 0
      %s282 = smul.addr %s279, 3
      %s283 = sadd.s32 %s281, %s282
      %s284 = smul.addr %s283, 8
      %s285 = scalar_lea.vmem %s4, %s284
      %p286 = scmp.lt.s32.totalorder %s21, 1
      %s287 = scalar_select %p286, %s21, 1
      %p288 = scmp.lt.s32.totalorder %s22, 0
      %s289 = scalar_select %p288, %s22, 0
      %s290 = smul.addr %s287, 3
      %s291 = sadd.s32 %s289, %s290
      %s292 = smul.addr %s291, 8
      %s293 = scalar_lea.vmem %s5, %s292
      %v295 = vld [vmem:[%s1] sm:$0xf]
      %v296 = vld [vmem:[%s1 + $0x4] sm:$0xf]
      %v297 = vld [vmem:[%s1 + $0x8] sm:$0xf]
      %v298 = vld [vmem:[%s273] sm:$0xf]
      %v299 = vld [vmem:[%s273 + $0x4] sm:$0xf]
      %v300 = vld [vmem:[%s273 + $0x8] sm:$0xf]
      %v301 = vld [vmem:[%s273 + $0xc] sm:$0xf]
      %v302 = vld [vmem:[%s273 + $0x10] sm:$0xf]
      %v303 = vld [vmem:[%s273 + $0x14] sm:$0xf]
      %v304 = vld [vmem:[%s273 + $0x18] sm:$0xf]
      %v305 = vld [vmem:[%s273 + $0x1c] sm:$0xf]
      %v306 = vld [vmem:[%s2] sm:$0xff]
      %v307 = vld [vmem:[%s2 + $0x8] sm:$0xff]
      %v308 = vld [vmem:[%s2 + $0x10] sm:$0xff]
      %310 = vset.pattern.permute.xlu0 0
      %311 = vperm.xlu0 %310, %v306
      %v312 = vpop.permute.xlu0 %311
      %315 = vset.pattern.permute.xlu0 0
      %316 = vperm.xlu0 %315, %v307
      %v317 = vpop.permute.xlu0 %316
      %320 = vset.pattern.permute.xlu0 0
      %321 = vperm.xlu0 %320, %v308
      %v322 = vpop.permute.xlu0 %321
      %v327 = vunpack.c.l.b16 %v295
      %v328 = vunpack.c.l.b16 %v296
      %v329 = vunpack.c.l.b16 %v297
      %v330 = vpack.c.b16 %v328, %v327
      %v331 = vpack.c.b16 %v329, %v329
      %v340 = vunpack.c.l.b16 %v298
      %v341 = vunpack.c.l.b16 %v299
      %v342 = vunpack.c.l.b16 %v300
      %v343 = vunpack.c.l.b16 %v301
      %v344 = vunpack.c.l.b16 %v302
      %v345 = vunpack.c.l.b16 %v303
      %v346 = vunpack.c.l.b16 %v304
      %v347 = vunpack.c.l.b16 %v305
      %v348 = vpack.c.b16 %v341, %v340
      %v349 = vpack.c.b16 %v343, %v342
      %v350 = vpack.c.b16 %v345, %v344
      %v351 = vpack.c.b16 %v347, %v346
      %vm356 = vcmask 523264
      %v358 = vsel %vm356, %v330, 0
      %v361 = vsel %vm356, %v331, 0
      %363 = vmatprep.subr.bf16.mxu0 0
      %364 = vmatpush1.bf16.msra.mxu0 0
      %365 = vmatprep.subr.bf16.mxu0 0
      %366 = vmatpush1.bf16.msra.mxu0 0
      %367 = vmatprep.subr.bf16.mxu0 0
      %368 = vmatpush1.bf16.msra.mxu0 0
      %369 = vmatprep.subr.bf16.mxu0 0
      %370 = vmatpush1.bf16.msra.mxu0 0
      %371 = vmatprep.subr.bf16.mxu0 0
      %372 = vmatpush1.bf16.msra.mxu0 %v351
      %373 = vmatprep.subr.bf16.mxu0 0
      %374 = vmatpush1.bf16.msra.mxu0 %v350
      %375 = vmatprep.subr.bf16.mxu0 0
      %376 = vmatpush1.bf16.msra.mxu0 %v349
      %377 = vmatprep.subr.bf16.mxu0 0
      %378 = vmatpush1.bf16.msra.mxu0 %v348
      %379 = vmatprep.subr.bf16.mxu0 0
      %380 = vmatpush2.bf16.msra.mxu0 0
      %381 = vmatprep.subr.bf16.mxu0 0
      %382 = vmatpush2.bf16.msra.mxu0 0
      %383 = vmatprep.subr.bf16.mxu0 0
      %384 = vmatpush2.bf16.msra.mxu0 0
      %385 = vmatprep.subr.bf16.mxu0 0
      %386 = vmatpush2.bf16.msra.mxu0 0
      %387 = vmatprep.subr.bf16.mxu0 0
      %388 = vmatpush2.bf16.msra.mxu0 0
      %389 = vmatprep.subr.bf16.mxu0 0
      %390 = vmatpush2.bf16.msra.mxu0 0
      %391 = vmatprep.subr.bf16.mxu0 0
      %392 = vmatpush2.bf16.msra.mxu0 0
      %393 = vmatprep.subr.bf16.mxu0 0
      %394 = vmatpush2.bf16.msra.mxu0 0
      %395 = vmatprep.mubr.bf16.mxu0 0
      %396 = vmatmul.mubr.bf16.gmra.mxu0 %v358
      %v397 = vpop.f32.mrf.mxu0
      %v398 = vadd.f32 %v312, %v397
      %v399 = vpop.f32.mrf.mxu0
      %v400 = vpop.f32.mrf.mxu0
      %v401 = vadd.f32 %v317, %v400
      %v402 = vpop.f32.mrf.mxu0
      %403 = vmatprep.mubr.bf16.mxu0 0
      %404 = vmatmul.mubr.bf16.gmra.mxu0 %v361
      %v405 = vpop.f32.mrf.mxu0
      %v406 = vadd.f32 %v322, %v405
      %v407 = vpop.f32.mrf.mxu0
      %v408 = vpop.f32.mrf.mxu0
      %v409 = vpop.f32.mrf.mxu0
      %410 = vdwg.mxu0
      %411 = vst [vmem:[%s285] sm:$0xff] %v398
      %412 = vst [vmem:[%s285 + $0x8] sm:$0xff] %v401
      %413 = vst [vmem:[%s285 + $0x10] sm:$0xff] %v406
      %v414 = vxor.u32 %v398, 2147483648
      %v415 = vxor.u32 %v401, 2147483648
      %v416 = vxor.u32 %v406, 2147483648
      %v417 = vmul.f32 %v414, 1.442695
      %v418 = vpow.pop %v417
      %v419 = vmul.f32 %v415, 1.442695
      %v420 = vpow.pop %v419
      %v421 = vmul.f32 %v416, 1.442695
      %v422 = vpow.pop %v421
      %v423 = vadd.f32 %v418, 1.0
      %v424 = vadd.f32 %v420, 1.0
      %v425 = vadd.f32 %v422, 1.0
      %v426 = vrcp.pop %v423
      %v427 = vmul.f32 1.0, %v426
      %v428 = vrcp.pop %v424
      %v429 = vmul.f32 1.0, %v428
      %v430 = vrcp.pop %v425
      %v431 = vmul.f32 1.0, %v430
      %v432 = vld [vmem:[%s277] sm:$0x1]
      %v433 = vld [vmem:[%s277 + $0x1] sm:$0x1]
      %434 = vset.pattern.permute.xlu0 1
      %435 = vperm.xlu0 %434, %v306
      %v436 = vpop.permute.xlu0 %435
      %438 = vset.pattern.permute.xlu0 1
      %439 = vperm.xlu0 %438, %v307
      %v440 = vpop.permute.xlu0 %439
      %442 = vset.pattern.permute.xlu0 1
      %443 = vperm.xlu0 %442, %v308
      %v444 = vpop.permute.xlu0 %443
      %v446 = vlaneseq
      %v447 = vshrl.u32 %v446, 7
      %v448 = vsub.s32 0, %v447
      %v449 = vrot.slane %v432, %v448
      %v450 = vmul.f32 %v436, %v449
      %v451 = vmul.f32 %v440, %v449
      %v452 = vmul.f32 %v444, %v449
      %453 = vset.pattern.permute.xlu0 2
      %454 = vperm.xlu0 %453, %v306
      %v455 = vpop.permute.xlu0 %454
      %457 = vset.pattern.permute.xlu0 2
      %458 = vperm.xlu0 %457, %v307
      %v459 = vpop.permute.xlu0 %458
      %461 = vset.pattern.permute.xlu0 2
      %462 = vperm.xlu0 %461, %v308
      %v463 = vpop.permute.xlu0 %462
      %v465 = vlaneseq
      %v466 = vshrl.u32 %v465, 7
      %v467 = vsub.s32 0, %v466
      %v468 = vrot.slane %v433, %v467
      %v469 = vmul.f32 %v455, %v468
      %v470 = vmul.f32 %v459, %v468
      %v471 = vmul.f32 %v463, %v468
      %v472 = vadd.f32 %v450, %v469
      %v473 = vadd.f32 %v451, %v470
      %v474 = vadd.f32 %v452, %v471
      %v475 = vmul.f32 %v427, 2.0
      %v476 = vmul.f32 %v429, 2.0
      %v477 = vmul.f32 %v431, 2.0
      %v478 = vsub.f32 %v475, 0.5
      %v479 = vsub.f32 %v476, 0.5
      %v480 = vsub.f32 %v477, 0.5
      %v481 = vadd.f32 %v478, %v472
      %v482 = vadd.f32 %v479, %v473
      %v483 = vadd.f32 %v480, %v474
      %v484 = vmul.f32 %v481, 32.0
      %v485 = vmul.f32 %v482, 32.0
      %v486 = vmul.f32 %v483, 32.0
      %v487 = vmul.f32 %v475, %v475
      %v488 = vmul.f32 %v476, %v476
      %v489 = vmul.f32 %v477, %v477
      %490 = vset.pattern.permute.xlu0 4
      %491 = vperm.xlu0 %490, %v306
      %v492 = vpop.permute.xlu0 %491
      %494 = vset.pattern.permute.xlu0 4
      %495 = vperm.xlu0 %494, %v307
      %v496 = vpop.permute.xlu0 %495
      %498 = vset.pattern.permute.xlu0 4
      %499 = vperm.xlu0 %498, %v308
      %v500 = vpop.permute.xlu0 %499
      %v502 = vmul.f32 %v487, %v492
      %v503 = vmul.f32 %v488, %v496
      %v504 = vmul.f32 %v489, %v500
      %505 = vset.pattern.permute.xlu0 5
      %506 = vperm.xlu0 %505, %v306
      %v507 = vpop.permute.xlu0 %506
      %509 = vset.pattern.permute.xlu0 5
      %510 = vperm.xlu0 %509, %v307
      %v511 = vpop.permute.xlu0 %510
      %513 = vset.pattern.permute.xlu0 5
      %514 = vperm.xlu0 %513, %v308
      %v515 = vpop.permute.xlu0 %514
      %v517 = vmul.f32 %v507, %v484
      %v518 = vmul.f32 %v511, %v485
      %v519 = vmul.f32 %v515, %v486
      %520 = vset.pattern.permute.xlu0 3
      %521 = vperm.xlu0 %520, %v306
      %v522 = vpop.permute.xlu0 %521
      %524 = vset.pattern.permute.xlu0 3
      %525 = vperm.xlu0 %524, %v307
      %v526 = vpop.permute.xlu0 %525
      %528 = vset.pattern.permute.xlu0 3
      %529 = vperm.xlu0 %528, %v308
      %v530 = vpop.permute.xlu0 %529
      %v532 = vmul.f32 %v522, %v502
      %v533 = vmul.f32 %v526, %v503
      %v534 = vmul.f32 %v530, %v504
      %v535 = vadd.f32 %v517, %v532
      %v536 = vadd.f32 %v518, %v533
      %v537 = vadd.f32 %v519, %v534
      %538 = vset.pattern.permute.xlu0 6
      %539 = vperm.xlu0 %538, %v306
      %v540 = vpop.permute.xlu0 %539
      %542 = vset.pattern.permute.xlu0 6
      %543 = vperm.xlu0 %542, %v307
      %v544 = vpop.permute.xlu0 %543
      %546 = vset.pattern.permute.xlu0 6
      %547 = vperm.xlu0 %546, %v308
      %v548 = vpop.permute.xlu0 %547
      %v550 = vmul.f32 %v540, %v427
      %v551 = vmul.f32 %v544, %v429
      %v552 = vmul.f32 %v548, %v431
      %v553 = vadd.f32 %v535, %v550
      %v554 = vadd.f32 %v536, %v551
      %v555 = vadd.f32 %v537, %v552
      %556 = vst [vmem:[%s293] sm:$0xff] %v553
      %557 = vst [vmem:[%s293 + $0x8] sm:$0xff] %v554
      %558 = vst [vmem:[%s293 + $0x10] sm:$0xff] %v555
      %p559 = scmp.lt.s32.totalorder %s21, 1
      %s560 = scalar_select %p559, %s21, 1
      %p561 = scmp.lt.s32.totalorder %s22, 0
      %s562 = scalar_select %p561, %s22, 0
      %s563 = smul.addr %s560, 3
      %s564 = sadd.s32 %s562, %s563
      %s565 = smul.addr %s564, 8
      %s566 = scalar_lea.vmem %s4, %s565
      %p567 = scmp.lt.s32.totalorder %s21, 1
      %s568 = scalar_select %p567, %s21, 1
      %p569 = scmp.lt.s32.totalorder %s22, 0
      %s570 = scalar_select %p569, %s22, 0
      %s571 = smul.addr %s568, 3
      %s572 = sadd.s32 %s570, %s571
      %s573 = smul.addr %s572, 8
      %s574 = scalar_lea.vmem %s5, %s573
      // Predicated region
      $region37: #{idetect_forward.5} parent=35 // pred_check
        %p575 = pneg %p145
      $region38: #{idetect_forward.5} parent=35 // pred_check_branch
        %577 = sbr.rel (%p575) target = $region40
      $region39: #{idetect_forward.5} parent=35 // pred_region
        _
      $region40: #{idetect_forward.5} parent=35 // pred_fallthru
        _
      // Predicated region
      $region41: #{idetect_forward.5} parent=35 // pred_check
        %p578 = pneg %p173
      $region42: #{idetect_forward.5} parent=35 // pred_check_branch
        %580 = sbr.rel (%p578) target = $region44
      $region43: #{idetect_forward.5} parent=35 // pred_region
        _
      $region44: #{idetect_forward.5} parent=35 // pred_fallthru
        _
    $region36: #{idetect_forward.5} parent=5 // pred_fallthru
      _
    %p581 = scmp.le.s32.totalorder 2, %s12
    // Predicated region
    $region45: #{idetect_forward.5} parent=5 // pred_check
      %p582 = pneg %p581
    $region46: #{idetect_forward.5} parent=5 // pred_check_branch
      %584 = sbr.rel (%p582) target = $region48
    $region47: #{idetect_forward.5} parent=5 // pred_region
      %s585 = ssub.s32 %s12, 2
      // Predicated region
      $region49: #{idetect_forward.5} parent=47 // pred_check
        %p586 = pneg %p151
      $region50: #{idetect_forward.5} parent=47 // pred_check_branch
        %588 = sbr.rel (%p586) target = $region52
      $region51: #{idetect_forward.5} parent=47 // pred_region
        %p589 = scmp.lt.s32.totalorder %s23, 1
        %s590 = scalar_select %p589, %s23, 1
        %p591 = scmp.lt.s32.totalorder %s24, 0
        %s592 = scalar_select %p591, %s24, 0
        %s593 = smul.addr %s590, 3
        %s594 = sadd.s32 %s592, %s593
        %s595 = smul.addr %s594, 8
        %s596 = scalar_lea.vmem %s4, %s595
      $region52: #{idetect_forward.5} parent=47 // pred_fallthru
        _
      // Predicated region
      $region53: #{idetect_forward.5} parent=47 // pred_check
        %p597 = pneg %p179
      $region54: #{idetect_forward.5} parent=47 // pred_check_branch
        %599 = sbr.rel (%p597) target = $region56
      $region55: #{idetect_forward.5} parent=47 // pred_region
        %p600 = scmp.lt.s32.totalorder %s23, 1
        %s601 = scalar_select %p600, %s23, 1
        %p602 = scmp.lt.s32.totalorder %s24, 0
        %s603 = scalar_select %p602, %s24, 0
        %s604 = smul.addr %s601, 3
        %s605 = sadd.s32 %s603, %s604
        %s606 = smul.addr %s605, 8
        %s607 = scalar_lea.vmem %s5, %s606
      $region56: #{idetect_forward.5} parent=47 // pred_fallthru
        _
    $region48: #{idetect_forward.5} parent=5 // pred_fallthru
      _
  $region6: #{idetect_forward.5} parent=0 // loop_footer
    %s16 = sadd.s32 1, %s12
  $region7: #{idetect_forward.5} parent=0 // loop_footer_branch
    %11 = sbr.rel target = $region3
  $region8: #{idetect_forward.5} parent=0 // loop_exit
    _

// kernel: idetect_forward.3
$region0: #{idetect_forward.3}
  #allocation0 [shape = 'u32[]', space=smem, size = 0x4, offset = 0x4, fixed_abs, tag = 'smem constant byte address 0x4 - core index']
  #allocation1 [shape = 'u32[144,128]{1,0:T(1,128)}', space=vmem, size = 0x12000, scoped, tag = 'internal scratch']
  %s0 = inlined_call_operand.vmem [shape: bf16[2,16,256], index: 0, kind: input, shape index: {}]
  %s1 = inlined_call_operand.vmem [shape: bf16[24,16], index: 1, kind: input, shape index: {}]
  %s2 = inlined_call_operand.vmem [shape: f32[24,8], index: 2, kind: input, shape index: {}]
  %s3 = inlined_call_operand.vmem [shape: f32[2,256], index: 3, kind: input, shape index: {}]
  %s4 = inlined_call_operand.vmem [shape: f32[2,24,256], index: 4, kind: output, shape index: {0}]
  %s5 = inlined_call_operand.vmem [shape: f32[2,24,256], index: 5, kind: output, shape index: {1}]
  %6 = xla_tuple %s4, %s5
  %s7 = sld [smem:[#allocation0]]
  $region57: #{idetect_forward.3} parent=0
    _
  %s9 = ssub.s32 1, %s7
  %s10 = scalar_select 0, %s9, %s7
  loop: start=0, step=1, limit=4
  $region2: #{idetect_forward.3} parent=0 // loop_pre_header
    _
  $region3: #{idetect_forward.3} parent=0 // loop_header
    %s12 = sphi 0, %s16
    %p13 = scmp.ge.s32.totalorder %s12, 4
    %s19 = sphi 0, %s31
    %s20 = sphi 0, %s27
    %s21 = sphi 0, %s19
    %s22 = sphi 0, %s20
    %s23 = sphi 0, %s21
    %s24 = sphi 0, %s22
    %s36 = sphi 0, %s38
    %s39 = sphi 0, %s36
    %s40 = sphi 0, %s39
    %s56 = sphi 0, %s40
    %s60 = sphi 0, %s60
    %s62 = sphi 0, %s60
    %s63 = sphi 0, %s62
    %s77 = sphi 0, %s63
    %s81 = sphi 0, %s81
    %s83 = sphi 0, %s81
    %s84 = sphi 0, %s83
    %s98 = sphi 0, %s84
    %s104 = sphi 0, %s106
    %s107 = sphi 0, %s104
    %s108 = sphi 0, %s107
    %s124 = sphi 0, %s108
    %s132 = sphi 0, %s134
    %s135 = sphi 0, %s132
    %s136 = sphi 0, %s135
    %s152 = sphi 0, %s136
    %s160 = sphi 0, %s162
    %s163 = sphi 0, %s160
    %s164 = sphi 0, %s163
    %s180 = sphi 0, %s164
  $region4: #{idetect_forward.3} parent=0 // loop_header_branch
    %15 = sbr.rel (%p13) target = $region8
  $region5: #{idetect_forward.3} parent=0 // loop_body
    %s17 = ssub.s32 %s12, 1
    %s18 = ssub.s32 %s12, 2
    %s25 = sadd.s32 1, %s20
    %p26 = scmp.ge.s32.totalorder %s25, 1
    %s27 = scalar_select %p26, 0, %s25
    %s28 = sadd.s32 1, %s19
    %s29 = scalar_select %p26, %s28, %s19
    %p30 = scmp.ge.s32.totalorder %s29, 2
    %s31 = scalar_select %p30, 0, %s29
    %s32 = ssub.s32 %s19, %s31
    %s33 = ssub.s32 %s20, %s27
    %s34 = sor.u32 %s32, %s33
    %p35 = scmp.eq.s32.totalorder %s34, 0
    %s37 = sadd.s32 %s36, 1
    %s38 = scalar_select %p35, %s36, %s37
    %p41 = pneg %p35
    %p42 = scmp.eq.s32.totalorder %s12, 1
    %p43 = por %p41, %p42
    %p44 = scmp.ne.s32.totalorder %s36, %s39
    %p45 = scmp.eq.s32.totalorder %s12, 0
    %p46 = por %p44, %p45
    %p47 = scmp.ne.s32.totalorder %s36, %s39
    %p48 = scmp.eq.s32.totalorder %s17, 1
    %p49 = por %p47, %p48
    %p50 = scmp.ne.s32.totalorder %s39, %s40
    %p51 = scmp.eq.s32.totalorder %s17, 0
    %p52 = por %p50, %p51
    %p53 = scmp.ne.s32.totalorder %s39, %s40
    %p54 = scmp.eq.s32.totalorder %s18, 1
    %p55 = por %p53, %p54
    %p57 = scmp.ne.s32.totalorder %s40, %s56
    %p58 = scmp.eq.s32.totalorder %s18, 0
    %p59 = por %p57, %p58
    %s61 = sadd.s32 %s60, 1
    %p64 = scmp.eq.s32.totalorder %s12, 1
    %p65 = scmp.ne.s32.totalorder %s60, %s62
    %p66 = scmp.eq.s32.totalorder %s12, 0
    %p67 = por %p65, %p66
    %p68 = scmp.ne.s32.totalorder %s60, %s62
    %p69 = scmp.eq.s32.totalorder %s17, 1
    %p70 = por %p68, %p69
    %p71 = scmp.ne.s32.totalorder %s62, %s63
    %p72 = scmp.eq.s32.totalorder %s17, 0
    %p73 = por %p71, %p72
    %p74 = scmp.ne.s32.totalorder %s62, %s63
    %p75 = scmp.eq.s32.totalorder %s18, 1
    %p76 = por %p74, %p75
    %p78 = scmp.ne.s32.totalorder %s63, %s77
    %p79 = scmp.eq.s32.totalorder %s18, 0
    %p80 = por %p78, %p79
    %s82 = sadd.s32 %s81, 1
    %p85 = scmp.eq.s32.totalorder %s12, 1
    %p86 = scmp.ne.s32.totalorder %s81, %s83
    %p87 = scmp.eq.s32.totalorder %s12, 0
    %p88 = por %p86, %p87
    %p89 = scmp.ne.s32.totalorder %s81, %s83
    %p90 = scmp.eq.s32.totalorder %s17, 1
    %p91 = por %p89, %p90
    %p92 = scmp.ne.s32.totalorder %s83, %s84
    %p93 = scmp.eq.s32.totalorder %s17, 0
    %p94 = por %p92, %p93
    %p95 = scmp.ne.s32.totalorder %s83, %s84
    %p96 = scmp.eq.s32.totalorder %s18, 1
    %p97 = por %p95, %p96
    %p99 = scmp.ne.s32.totalorder %s84, %s98
    %p100 = scmp.eq.s32.totalorder %s18, 0
    %p101 = por %p99, %p100
    %s102 = ssub.s32 %s20, %s27
    %p103 = scmp.eq.s32.totalorder %s102, 0
    %s105 = sadd.s32 %s104, 1
    %s106 = scalar_select %p103, %s104, %s105
    %p109 = pneg %p103
    %p110 = scmp.eq.s32.totalorder %s12, 1
    %p111 = por %p109, %p110
    %p112 = scmp.ne.s32.totalorder %s104, %s107
    %p113 = scmp.eq.s32.totalorder %s12, 0
    %p114 = por %p112, %p113
    %p115 = scmp.ne.s32.totalorder %s104, %s107
    %p116 = scmp.eq.s32.totalorder %s17, 1
    %p117 = por %p115, %p116
    %p118 = scmp.ne.s32.totalorder %s107, %s108
    %p119 = scmp.eq.s32.totalorder %s17, 0
    %p120 = por %p118, %p119
    %p121 = scmp.ne.s32.totalorder %s107, %s108
    %p122 = scmp.eq.s32.totalorder %s18, 1
    %p123 = por %p121, %p122
    %p125 = scmp.ne.s32.totalorder %s108, %s124
    %p126 = scmp.eq.s32.totalorder %s18, 0
    %p127 = por %p125, %p126
    %s128 = ssub.s32 %s19, %s31
    %s129 = ssub.s32 %s20, %s27
    %s130 = sor.u32 %s128, %s129
    %p131 = scmp.eq.s32.totalorder %s130, 0
    %s133 = sadd.s32 %s132, 1
    %s134 = scalar_select %p131, %s132, %s133
    %p137 = pneg %p131
    %p138 = scmp.eq.s32.totalorder %s12, 1
    %p139 = por %p137, %p138
    %p140 = scmp.ne.s32.totalorder %s132, %s135
    %p141 = scmp.eq.s32.totalorder %s12, 0
    %p142 = por %p140, %p141
    %p143 = scmp.ne.s32.totalorder %s132, %s135
    %p144 = scmp.eq.s32.totalorder %s17, 1
    %p145 = por %p143, %p144
    %p146 = scmp.ne.s32.totalorder %s135, %s136
    %p147 = scmp.eq.s32.totalorder %s17, 0
    %p148 = por %p146, %p147
    %p149 = scmp.ne.s32.totalorder %s135, %s136
    %p150 = scmp.eq.s32.totalorder %s18, 1
    %p151 = por %p149, %p150
    %p153 = scmp.ne.s32.totalorder %s136, %s152
    %p154 = scmp.eq.s32.totalorder %s18, 0
    %p155 = por %p153, %p154
    %s156 = ssub.s32 %s19, %s31
    %s157 = ssub.s32 %s20, %s27
    %s158 = sor.u32 %s156, %s157
    %p159 = scmp.eq.s32.totalorder %s158, 0
    %s161 = sadd.s32 %s160, 1
    %s162 = scalar_select %p159, %s160, %s161
    %p165 = pneg %p159
    %p166 = scmp.eq.s32.totalorder %s12, 1
    %p167 = por %p165, %p166
    %p168 = scmp.ne.s32.totalorder %s160, %s163
    %p169 = scmp.eq.s32.totalorder %s12, 0
    %p170 = por %p168, %p169
    %p171 = scmp.ne.s32.totalorder %s160, %s163
    %p172 = scmp.eq.s32.totalorder %s17, 1
    %p173 = por %p171, %p172
    %p174 = scmp.ne.s32.totalorder %s163, %s164
    %p175 = scmp.eq.s32.totalorder %s17, 0
    %p176 = por %p174, %p175
    %p177 = scmp.ne.s32.totalorder %s163, %s164
    %p178 = scmp.eq.s32.totalorder %s18, 1
    %p179 = por %p177, %p178
    %p181 = scmp.ne.s32.totalorder %s164, %s180
    %p182 = scmp.eq.s32.totalorder %s18, 0
    %p183 = por %p181, %p182
    %p184 = scmp.le.s32.totalorder 1, %s12
    %p185 = scmp.lt.s32.totalorder %s12, 3
    %p186 = pnand %p184, %p185
    %p187 = pneg %p186
    // Predicated region
    $region9: #{idetect_forward.3} parent=5 // pred_check
      _
    $region10: #{idetect_forward.3} parent=5 // pred_check_branch
      %189 = sbr.rel (%p186) target = $region12
    $region11: #{idetect_forward.3} parent=5 // pred_region
      %s190 = ssub.s32 %s12, 1
      // Predicated region
      $region13: #{idetect_forward.3} parent=11 // pred_check
        %p191 = pneg %p73
      $region14: #{idetect_forward.3} parent=11 // pred_check_branch
        %193 = sbr.rel (%p191) target = $region16
      $region15: #{idetect_forward.3} parent=11 // pred_region
        _
      $region16: #{idetect_forward.3} parent=11 // pred_fallthru
        _
      // Predicated region
      $region17: #{idetect_forward.3} parent=11 // pred_check
        %p194 = pneg %p94
      $region18: #{idetect_forward.3} parent=11 // pred_check_branch
        %196 = sbr.rel (%p194) target = $region20
      $region19: #{idetect_forward.3} parent=11 // pred_region
        _
      $region20: #{idetect_forward.3} parent=11 // pred_fallthru
        _
      // Predicated region
      $region21: #{idetect_forward.3} parent=11 // pred_check
        %p197 = pneg %p120
      $region22: #{idetect_forward.3} parent=11 // pred_check_branch
        %199 = sbr.rel (%p197) target = $region24
      $region23: #{idetect_forward.3} parent=11 // pred_region
        %s200 = smul.u32 2, %s22
        %p201 = scmp.lt.s32.totalorder %s200, 1
        %s202 = scalar_select %p201, %s200, 1
        %s203 = smul.addr %s202, 2
        %s204 = scalar_lea.vmem %s3, %s203
        %s205 = smul.u32 2, %s22
      $region24: #{idetect_forward.3} parent=11 // pred_fallthru
        _
    $region12: #{idetect_forward.3} parent=5 // pred_fallthru
      _
    %p206 = scmp.lt.s32.totalorder %s12, 2
    // Predicated region
    $region25: #{idetect_forward.3} parent=5 // pred_check
      %p207 = pneg %p206
    $region26: #{idetect_forward.3} parent=5 // pred_check_branch
      %209 = sbr.rel (%p207) target = $region28
    $region27: #{idetect_forward.3} parent=5 // pred_region
      // Predicated region
      $region29: #{idetect_forward.3} parent=27 // pred_check
        %p210 = pneg %p46
      $region30: #{idetect_forward.3} parent=27 // pred_check_branch
        %212 = sbr.rel (%p210) target = $region32
      $region31: #{idetect_forward.3} parent=27 // pred_region
        %s213 = smul.u32 2, %s20
        %p214 = scmp.lt.s32.totalorder %s19, 1
        %s215 = scalar_select %p214, %s19, 1
        %p216 = scmp.lt.s32.totalorder %s213, 1
        %s217 = scalar_select %p216, %s213, 1
        %s218 = smul.addr %s215, 4
        %s219 = sadd.s32 %s217, %s218
        %s220 = smul.addr %s219, 4
        %s221 = scalar_lea.vmem %s0, %s220
        %s222 = smul.u32 2, %s20
      $region32: #{idetect_forward.3} parent=27 // pred_fallthru
        _
    $region28: #{idetect_forward.3} parent=5 // pred_fallthru
      _
    %p223 = scmp.le.s32.totalorder 1, %s12
    %p224 = scmp.lt.s32.totalorder %s12, 3
    %p225 = pnand %p223, %p224
    %p226 = pneg %p225
    // Predicated region
    $region33: #{idetect_forward.3} parent=5 // pred_check
      _
    $region34: #{idetect_forward.3} parent=5 // pred_check_branch
      %228 = sbr.rel (%p225) target = $region36
    $region35: #{idetect_forward.3} parent=5 // pred_region
      %s229 = ssub.s32 %s12, 1
      %s230 = smul.u32 2, %s22
      %p231 = scmp.lt.s32.totalorder %s21, 1
      %s232 = scalar_select %p231, %s21, 1
      %p233 = scmp.lt.s32.totalorder %s230, 1
      %s234 = scalar_select %p233, %s230, 1
      %s235 = smul.addr %s232, 4
      %s236 = sadd.s32 %s234, %s235
      %s237 = smul.addr %s236, 4
      %s238 = scalar_lea.vmem %s0, %s237
      %p239 = pneg %p52
      %p240 = pneg %p49
      %p241 = pneg %p73
      %p242 = pneg %p70
      %p243 = pneg %p94
      %p244 = pneg %p91
      %s245 = smul.u32 2, %s22
      %p246 = scmp.lt.s32.totalorder %s245, 1
      %s247 = scalar_select %p246, %s245, 1
      %s248 = smul.addr %s247, 2
      %s249 = scalar_lea.vmem %s3, %s248
      %p250 = pneg %p120
      %p251 = pneg %p117
      %p252 = pneg %p148
      %p253 = pneg %p145
      %s254 = smul.u32 2, %s22
      %p255 = scmp.lt.s32.totalorder %s21, 1
      %s256 = scalar_select %p255, %s21, 1
      %p257 = scmp.lt.s32.totalorder %s254, 1
      %s258 = scalar_select %p257, %s254, 1
      %s259 = smul.addr %s256, 6
      %s260 = sadd.s32 %s258, %s259
      %s261 = smul.addr %s260, 8
      %s262 = scalar_lea.vmem %s4, %s261
      %p263 = pneg %p176
      %p264 = pneg %p173
      %s265 = smul.u32 2, %s22
      %p266 = scmp.lt.s32.totalorder %s21, 1
      %s267 = scalar_select %p266, %s21, 1
      %p268 = scmp.lt.s32.totalorder %s265, 1
      %s269 = scalar_select %p268, %s265, 1
      %s270 = smul.addr %s267, 6
      %s271 = sadd.s32 %s269, %s270
      %s272 = smul.addr %s271, 8
      %s273 = scalar_lea.vmem %s5, %s272
      %s274 = smul.u32 2, %s22
      %p275 = scmp.lt.s32.totalorder %s21, 1
      %s276 = scalar_select %p275, %s21, 1
      %p277 = scmp.lt.s32.totalorder %s274, 1
      %s278 = scalar_select %p277, %s274, 1
      %s279 = smul.addr %s276, 4
      %s280 = sadd.s32 %s278, %s279
      %s281 = smul.addr %s280, 4
      %s282 = scalar_lea.vmem %s0, %s281
      %s283 = smul.u32 2, %s22
      %s284 = smul.u32 2, %s22
      %p285 = scmp.lt.s32.totalorder %s284, 1
      %s286 = scalar_select %p285, %s284, 1
      %s287 = smul.addr %s286, 2
      %s288 = scalar_lea.vmem %s3, %s287
      %s289 = smul.u32 2, %s22
      %s290 = smul.u32 2, %s22
      %p291 = scmp.lt.s32.totalorder %s21, 1
      %s292 = scalar_select %p291, %s21, 1
      %p293 = scmp.lt.s32.totalorder %s290, 1
      %s294 = scalar_select %p293, %s290, 1
      %s295 = smul.addr %s292, 6
      %s296 = sadd.s32 %s294, %s295
      %s297 = smul.addr %s296, 8
      %s298 = scalar_lea.vmem %s4, %s297
      %s299 = smul.u32 2, %s22
      %s300 = smul.u32 2, %s22
      %p301 = scmp.lt.s32.totalorder %s21, 1
      %s302 = scalar_select %p301, %s21, 1
      %p303 = scmp.lt.s32.totalorder %s300, 1
      %s304 = scalar_select %p303, %s300, 1
      %s305 = smul.addr %s302, 6
      %s306 = sadd.s32 %s304, %s305
      %s307 = smul.addr %s306, 8
      %s308 = scalar_lea.vmem %s5, %s307
      %s309 = smul.u32 2, %s22
      %v311 = vld [vmem:[%s1] sm:$0xf]
      %v312 = vld [vmem:[%s1 + $0x4] sm:$0xf]
      %v313 = vld [vmem:[%s1 + $0x8] sm:$0xf]
      %v314 = vld [vmem:[%s282] sm:$0xff]
      %v315 = vld [vmem:[%s282 + $0x8] sm:$0xff]
      %v316 = vld [vmem:[%s2] sm:$0xff]
      %v317 = vld [vmem:[%s2 + $0x8] sm:$0xff]
      %v318 = vld [vmem:[%s2 + $0x10] sm:$0xff]
      %320 = vset.pattern.permute.xlu0 0
      %321 = vperm.xlu0 %320, %v316
      %v322 = vpop.permute.xlu0 %321
      %325 = vset.pattern.permute.xlu0 0
      %326 = vperm.xlu0 %325, %v317
      %v327 = vpop.permute.xlu0 %326
      %330 = vset.pattern.permute.xlu0 0
      %331 = vperm.xlu0 %330, %v318
      %v332 = vpop.permute.xlu0 %331
      %v337 = vunpack.c.l.b16 %v311
      %v338 = vunpack.c.l.b16 %v312
      %v339 = vunpack.c.l.b16 %v313
      %v340 = vpack.c.b16 %v338, %v337
      %v341 = vpack.c.b16 %v339, %v339
      %v344 = vunpack.c.l.b16 %v314
      %v345 = vunpack.c.h.b16 %v314
      %v346 = vunpack.c.l.b16 %v315
      %v347 = vunpack.c.h.b16 %v315
      %v348 = vpack.c.b16 %v346, %v344
      %v349 = vpack.c.b16 %v347, %v345
      %vm352 = vcmask 130048
      %v354 = vsel %vm352, %v340, 0
      %v357 = vsel %vm352, %v341, 0
      %359 = vmatprep.subr.bf16.mxu0 0
      %360 = vmatpush1.bf16.msra.mxu0 0
      %361 = vmatprep.subr.bf16.mxu0 0
      %362 = vmatpush1.bf16.msra.mxu0 0
      %363 = vmatprep.subr.bf16.mxu0 0
      %364 = vmatpush1.bf16.msra.mxu0 0
      %365 = vmatprep.subr.bf16.mxu0 0
      %366 = vmatpush1.bf16.msra.mxu0 0
      %367 = vmatprep.subr.bf16.mxu0 0
      %368 = vmatpush1.bf16.msra.mxu0 0
      %369 = vmatprep.subr.bf16.mxu0 0
      %370 = vmatpush1.bf16.msra.mxu0 0
      %371 = vmatprep.subr.bf16.mxu0 0
      %372 = vmatpush1.bf16.msra.mxu0 0
      %373 = vmatprep.subr.bf16.mxu0 %v349
      %374 = vmatpush1.bf16.msra.mxu0 %v348
      %375 = vmatprep.subr.bf16.mxu0 0
      %376 = vmatpush2.bf16.msra.mxu0 0
      %377 = vmatprep.subr.bf16.mxu0 0
      %378 = vmatpush2.bf16.msra.mxu0 0
      %379 = vmatprep.subr.bf16.mxu0 0
      %380 = vmatpush2.bf16.msra.mxu0 0
      %381 = vmatprep.subr.bf16.mxu0 0
      %382 = vmatpush2.bf16.msra.mxu0 0
      %383 = vmatprep.subr.bf16.mxu0 0
      %384 = vmatpush2.bf16.msra.mxu0 0
      %385 = vmatprep.subr.bf16.mxu0 0
      %386 = vmatpush2.bf16.msra.mxu0 0
      %387 = vmatprep.subr.bf16.mxu0 0
      %388 = vmatpush2.bf16.msra.mxu0 0
      %389 = vmatprep.subr.bf16.mxu0 0
      %390 = vmatpush2.bf16.msra.mxu0 0
      %391 = vmatprep.mubr.bf16.mxu0 0
      %392 = vmatmul.mubr.bf16.gmra.mxu0 %v354
      %v393 = vpop.f32.mrf.mxu0
      %v394 = vadd.f32 %v322, %v393
      %v395 = vpop.f32.mrf.mxu0
      %v396 = vadd.f32 %v322, %v395
      %v397 = vpop.f32.mrf.mxu0
      %v398 = vadd.f32 %v327, %v397
      %v399 = vpop.f32.mrf.mxu0
      %v400 = vadd.f32 %v327, %v399
      %401 = vmatprep.mubr.bf16.mxu0 0
      %402 = vmatmul.mubr.bf16.gmra.mxu0 %v357
      %v403 = vpop.f32.mrf.mxu0
      %v404 = vadd.f32 %v332, %v403
      %v405 = vpop.f32.mrf.mxu0
      %v406 = vadd.f32 %v332, %v405
      %v407 = vpop.f32.mrf.mxu0
      %v408 = vpop.f32.mrf.mxu0
      %409 = vdwg.mxu0
      %410 = vst [vmem:[%s298] sm:$0xff] %v394
      %411 = vst [vmem:[%s298 + $0x8] sm:$0xff] %v396
      %412 = vst [vmem:[%s298 + $0x10] sm:$0xff] %v398
      %413 = vst [vmem:[%s298 + $0x18] sm:$0xff] %v400
      %414 = vst [vmem:[%s298 + $0x20] sm:$0xff] %v404
      %415 = vst [vmem:[%s298 + $0x28] sm:$0xff] %v406
      %v416 = vxor.u32 %v394, 2147483648
      %v417 = vxor.u32 %v396, 2147483648
      %v418 = vxor.u32 %v398, 2147483648
      %v419 = vxor.u32 %v400, 2147483648
      %v420 = vxor.u32 %v404, 2147483648
      %v421 = vxor.u32 %v406, 2147483648
      %v422 = vmul.f32 %v416, 1.442695
      %v423 = vpow.pop %v422
      %v424 = vmul.f32 %v417, 1.442695
      %v425 = vpow.pop %v424
      %v426 = vmul.f32 %v418, 1.442695
      %v427 = vpow.pop %v426
      %v428 = vmul.f32 %v419, 1.442695
      %v429 = vpow.pop %v428
      %v430 = vmul.f32 %v420, 1.442695
      %v431 = vpow.pop %v430
      %v432 = vmul.f32 %v421, 1.442695
      %v433 = vpow.pop %v432
      %v434 = vadd.f32 %v423, 1.0
      %v435 = vadd.f32 %v425, 1.0
      %v436 = vadd.f32 %v427, 1.0
      %v437 = vadd.f32 %v429, 1.0
      %v438 = vadd.f32 %v431, 1.0
      %v439 = vadd.f32 %v433, 1.0
      %v440 = vrcp.pop %v434
      %v441 = vmul.f32 1.0, %v440
      %v442 = vrcp.pop %v435
      %v443 = vmul.f32 1.0, %v442
      %v444 = vrcp.pop %v436
      %v445 = vmul.f32 1.0, %v444
      %v446 = vrcp.pop %v437
      %v447 = vmul.f32 1.0, %v446
      %v448 = vrcp.pop %v438
      %v449 = vmul.f32 1.0, %v448
      %v450 = vrcp.pop %v439
      %v451 = vmul.f32 1.0, %v450
      %v452 = vld [vmem:[%s288] ss:$2 sm:$0x3]
      %s453 = scalar_lea.vmem %s288, 1
      %v454 = vld [vmem:[%s453] ss:$2 sm:$0x3]
      %455 = vset.pattern.permute.xlu0 1
      %456 = vperm.xlu0 %455, %v316
      %v457 = vpop.permute.xlu0 %456
      %459 = vset.pattern.permute.xlu0 1
      %460 = vperm.xlu0 %459, %v317
      %v461 = vpop.permute.xlu0 %460
      %463 = vset.pattern.permute.xlu0 1
      %464 = vperm.xlu0 %463, %v318
      %v465 = vpop.permute.xlu0 %464
      %v468 = vlaneseq
      %v469 = vshrl.u32 %v468, 7
      %v470 = vsub.s32 0, %v469
      %v471 = vrot.slane %v452, %v470
      %v472 = vlaneseq
      %v473 = vshrl.u32 %v472, 7
      %v474 = vsub.s32 1, %v473
      %v475 = vrot.slane %v452, %v474
      %v478 = vmul.f32 %v457, %v471
      %v479 = vmul.f32 %v457, %v475
      %v480 = vmul.f32 %v461, %v471
      %v481 = vmul.f32 %v461, %v475
      %v482 = vmul.f32 %v465, %v471
      %v483 = vmul.f32 %v465, %v475
      %484 = vset.pattern.permute.xlu0 2
      %485 = vperm.xlu0 %484, %v316
      %v486 = vpop.permute.xlu0 %485
      %488 = vset.pattern.permute.xlu0 2
      %489 = vperm.xlu0 %488, %v317
      %v490 = vpop.permute.xlu0 %489
      %492 = vset.pattern.permute.xlu0 2
      %493 = vperm.xlu0 %492, %v318
      %v494 = vpop.permute.xlu0 %493
      %v497 = vlaneseq
      %v498 = vshrl.u32 %v497, 7
      %v499 = vsub.s32 0, %v498
      %v500 = vrot.slane %v454, %v499
      %v501 = vlaneseq
      %v502 = vshrl.u32 %v501, 7
      %v503 = vsub.s32 1, %v502
      %v504 = vrot.slane %v454, %v503
      %v507 = vmul.f32 %v486, %v500
      %v508 = vmul.f32 %v486, %v504
      %v509 = vmul.f32 %v490, %v500
      %v510 = vmul.f32 %v490, %v504
      %v511 = vmul.f32 %v494, %v500
      %v512 = vmul.f32 %v494, %v504
      %v513 = vadd.f32 %v478, %v507
      %v514 = vadd.f32 %v479, %v508
      %v515 = vadd.f32 %v480, %v509
      %v516 = vadd.f32 %v481, %v510
      %v517 = vadd.f32 %v482, %v511
      %v518 = vadd.f32 %v483, %v512
      %v519 = vmul.f32 %v441, 2.0
      %v520 = vmul.f32 %v443, 2.0
      %v521 = vmul.f32 %v445, 2.0
      %v522 = vmul.f32 %v447, 2.0
      %v523 = vmul.f32 %v449, 2.0
      %v524 = vmul.f32 %v451, 2.0
      %v525 = vsub.f32 %v519, 0.5
      %v526 = vsub.f32 %v520, 0.5
      %v527 = vsub.f32 %v521, 0.5
      %v528 = vsub.f32 %v522, 0.5
      %v529 = vsub.f32 %v523, 0.5
      %v530 = vsub.f32 %v524, 0.5
      %v531 = vadd.f32 %v525, %v513
      %v532 = vadd.f32 %v526, %v514
      %v533 = vadd.f32 %v527, %v515
      %v534 = vadd.f32 %v528, %v516
      %v535 = vadd.f32 %v529, %v517
      %v536 = vadd.f32 %v530, %v518
      %v537 = vmul.f32 %v531, 8.0
      %v538 = vmul.f32 %v532, 8.0
      %v539 = vmul.f32 %v533, 8.0
      %v540 = vmul.f32 %v534, 8.0
      %v541 = vmul.f32 %v535, 8.0
      %v542 = vmul.f32 %v536, 8.0
      %v543 = vmul.f32 %v519, %v519
      %v544 = vmul.f32 %v520, %v520
      %v545 = vmul.f32 %v521, %v521
      %v546 = vmul.f32 %v522, %v522
      %v547 = vmul.f32 %v523, %v523
      %v548 = vmul.f32 %v524, %v524
      %549 = vset.pattern.permute.xlu0 4
      %550 = vperm.xlu0 %549, %v316
      %v551 = vpop.permute.xlu0 %550
      %553 = vset.pattern.permute.xlu0 4
      %554 = vperm.xlu0 %553, %v317
      %v555 = vpop.permute.xlu0 %554
      %557 = vset.pattern.permute.xlu0 4
      %558 = vperm.xlu0 %557, %v318
      %v559 = vpop.permute.xlu0 %558
      %v561 = vmul.f32 %v543, %v551
      %v562 = vmul.f32 %v544, %v551
      %v563 = vmul.f32 %v545, %v555
      %v564 = vmul.f32 %v546, %v555
      %v565 = vmul.f32 %v547, %v559
      %v566 = vmul.f32 %v548, %v559
      %567 = vset.pattern.permute.xlu0 5
      %568 = vperm.xlu0 %567, %v316
      %v569 = vpop.permute.xlu0 %568
      %571 = vset.pattern.permute.xlu0 5
      %572 = vperm.xlu0 %571, %v317
      %v573 = vpop.permute.xlu0 %572
      %575 = vset.pattern.permute.xlu0 5
      %576 = vperm.xlu0 %575, %v318
      %v577 = vpop.permute.xlu0 %576
      %v579 = vmul.f32 %v569, %v537
      %v580 = vmul.f32 %v569, %v538
      %v581 = vmul.f32 %v573, %v539
      %v582 = vmul.f32 %v573, %v540
      %v583 = vmul.f32 %v577, %v541
      %v584 = vmul.f32 %v577, %v542
      %585 = vset.pattern.permute.xlu0 3
      %586 = vperm.xlu0 %585, %v316
      %v587 = vpop.permute.xlu0 %586
      %589 = vset.pattern.permute.xlu0 3
      %590 = vperm.xlu0 %589, %v317
      %v591 = vpop.permute.xlu0 %590
      %593 = vset.pattern.permute.xlu0 3
      %594 = vperm.xlu0 %593, %v318
      %v595 = vpop.permute.xlu0 %594
      %v597 = vmul.f32 %v587, %v561
      %v598 = vmul.f32 %v587, %v562
      %v599 = vmul.f32 %v591, %v563
      %v600 = vmul.f32 %v591, %v564
      %v601 = vmul.f32 %v595, %v565
      %v602 = vmul.f32 %v595, %v566
      %v603 = vadd.f32 %v579, %v597
      %v604 = vadd.f32 %v580, %v598
      %v605 = vadd.f32 %v581, %v599
      %v606 = vadd.f32 %v582, %v600
      %v607 = vadd.f32 %v583, %v601
      %v608 = vadd.f32 %v584, %v602
      %609 = vset.pattern.permute.xlu0 6
      %610 = vperm.xlu0 %609, %v316
      %v611 = vpop.permute.xlu0 %610
      %613 = vset.pattern.permute.xlu0 6
      %614 = vperm.xlu0 %613, %v317
      %v615 = vpop.permute.xlu0 %614
      %617 = vset.pattern.permute.xlu0 6
      %618 = vperm.xlu0 %617, %v318
      %v619 = vpop.permute.xlu0 %618
      %v621 = vmul.f32 %v611, %v441
      %v622 = vmul.f32 %v611, %v443
      %v623 = vmul.f32 %v615, %v445
      %v624 = vmul.f32 %v615, %v447
      %v625 = vmul.f32 %v619, %v449
      %v626 = vmul.f32 %v619, %v451
      %v627 = vadd.f32 %v603, %v621
      %v628 = vadd.f32 %v604, %v622
      %v629 = vadd.f32 %v605, %v623
      %v630 = vadd.f32 %v606, %v624
      %v631 = vadd.f32 %v607, %v625
      %v632 = vadd.f32 %v608, %v626
      %633 = vst [vmem:[%s308] sm:$0xff] %v627
      %634 = vst [vmem:[%s308 + $0x8] sm:$0xff] %v628
      %635 = vst [vmem:[%s308 + $0x10] sm:$0xff] %v629
      %636 = vst [vmem:[%s308 + $0x18] sm:$0xff] %v630
      %637 = vst [vmem:[%s308 + $0x20] sm:$0xff] %v631
      %638 = vst [vmem:[%s308 + $0x28] sm:$0xff] %v632
      %s639 = smul.u32 2, %s22
      %p640 = scmp.lt.s32.totalorder %s21, 1
      %s641 = scalar_select %p640, %s21, 1
      %p642 = scmp.lt.s32.totalorder %s639, 1
      %s643 = scalar_select %p642, %s639, 1
      %s644 = smul.addr %s641, 6
      %s645 = sadd.s32 %s643, %s644
      %s646 = smul.addr %s645, 8
      %s647 = scalar_lea.vmem %s4, %s646
      %s648 = smul.u32 2, %s22
      %p649 = scmp.lt.s32.totalorder %s21, 1
      %s650 = scalar_select %p649, %s21, 1
      %p651 = scmp.lt.s32.totalorder %s648, 1
      %s652 = scalar_select %p651, %s648, 1
      %s653 = smul.addr %s650, 6
      %s654 = sadd.s32 %s652, %s653
      %s655 = smul.addr %s654, 8
      %s656 = scalar_lea.vmem %s5, %s655
      // Predicated region
      $region37: #{idetect_forward.3} parent=35 // pred_check
        %p657 = pneg %p145
      $region38: #{idetect_forward.3} parent=35 // pred_check_branch
        %659 = sbr.rel (%p657) target = $region40
      $region39: #{idetect_forward.3} parent=35 // pred_region
        %s660 = smul.u32 2, %s22
      $region40: #{idetect_forward.3} parent=35 // pred_fallthru
        _
      // Predicated region
      $region41: #{idetect_forward.3} parent=35 // pred_check
        %p661 = pneg %p173
      $region42: #{idetect_forward.3} parent=35 // pred_check_branch
        %663 = sbr.rel (%p661) target = $region44
      $region43: #{idetect_forward.3} parent=35 // pred_region
        %s664 = smul.u32 2, %s22
      $region44: #{idetect_forward.3} parent=35 // pred_fallthru
        _
    $region36: #{idetect_forward.3} parent=5 // pred_fallthru
      _
    %p665 = scmp.le.s32.totalorder 2, %s12
    // Predicated region
    $region45: #{idetect_forward.3} parent=5 // pred_check
      %p666 = pneg %p665
    $region46: #{idetect_forward.3} parent=5 // pred_check_branch
      %668 = sbr.rel (%p666) target = $region48
    $region47: #{idetect_forward.3} parent=5 // pred_region
      %s669 = ssub.s32 %s12, 2
      // Predicated region
      $region49: #{idetect_forward.3} parent=47 // pred_check
        %p670 = pneg %p151
      $region50: #{idetect_forward.3} parent=47 // pred_check_branch
        %672 = sbr.rel (%p670) target = $region52
      $region51: #{idetect_forward.3} parent=47 // pred_region
        %s673 = smul.u32 2, %s24
        %p674 = scmp.lt.s32.totalorder %s23, 1
        %s675 = scalar_select %p674, %s23, 1
        %p676 = scmp.lt.s32.totalorder %s673, 1
        %s677 = scalar_select %p676, %s673, 1
        %s678 = smul.addr %s675, 6
        %s679 = sadd.s32 %s677, %s678
        %s680 = smul.addr %s679, 8
        %s681 = scalar_lea.vmem %s4, %s680
      $region52: #{idetect_forward.3} parent=47 // pred_fallthru
        _
      // Predicated region
      $region53: #{idetect_forward.3} parent=47 // pred_check
        %p682 = pneg %p179
      $region54: #{idetect_forward.3} parent=47 // pred_check_branch
        %684 = sbr.rel (%p682) target = $region56
      $region55: #{idetect_forward.3} parent=47 // pred_region
        %s685 = smul.u32 2, %s24
        %p686 = scmp.lt.s32.totalorder %s23, 1
        %s687 = scalar_select %p686, %s23, 1
        %p688 = scmp.lt.s32.totalorder %s685, 1
        %s689 = scalar_select %p688, %s685, 1
        %s690 = smul.addr %s687, 6
        %s691 = sadd.s32 %s689, %s690
        %s692 = smul.addr %s691, 8
        %s693 = scalar_lea.vmem %s5, %s692
      $region56: #{idetect_forward.3} parent=47 // pred_fallthru
        _
    $region48: #{idetect_forward.3} parent=5 // pred_fallthru
      _
  $region6: #{idetect_forward.3} parent=0 // loop_footer
    %s16 = sadd.s32 1, %s12
  $region7: #{idetect_forward.3} parent=0 // loop_footer_branch
    %11 = sbr.rel target = $region3
  $region8: #{idetect_forward.3} parent=0 // loop_exit
    _

</llo_original>
